<compile_context>
chip_gen: v6e
topology: v6e:2x2x1
jax: 0.10.0
libtpu: 0.0.40
codegen_flags: <defaults>
</compile_context>

<pallas_src>
import math
import jax
import jax.numpy as jnp
from jax.experimental import pallas as pl
from jax.experimental.pallas import tpu as pltpu

# ----------------------------- mini-BERT config ------------------------------
BATCH = 2
SEQ = 8
HIDDEN = 32          # scaled down from 768
NUM_HEADS = 2
HEAD_DIM = HIDDEN // NUM_HEADS
INTERMEDIATE = 64    # scaled down from 3072
NUM_LAYERS = 2       # scaled down from 12
VOCAB = 128
MAX_POS = 16
TYPE_VOCAB = 2
LN_EPS = 1e-12       # BERT default layer_norm_eps


# ------------------------------ kernel helpers --------------------------------
def _layer_norm(x, gamma, beta):
    mean = jnp.mean(x, axis=-1, keepdims=True)
    var = jnp.mean((x - mean) ** 2, axis=-1, keepdims=True)
    return (x - mean) * jax.lax.rsqrt(var + LN_EPS) * gamma + beta


def _softmax_last(x):
    m = jnp.max(x, axis=-1, keepdims=True)
    e = jnp.exp(x - m)
    # approx reciprocal -> EUP slot (otherwise idle), divide is essentially free.
    return e * pl.reciprocal(jnp.sum(e, axis=-1, keepdims=True), approx=True)


def _gelu_exact(x):
    # HF BERT default activation is exact (erf-based) GELU.
    return 0.5 * x * (1.0 + jax.lax.erf(x * 0.7071067811865476))


# ------------------------------ fused Pallas kernel ----------------------------
def bert_fused_kernel(emb_ref, mask_ref, embg_ref, embb_ref,
                      wqkv_ref, bqkv_ref, wo_ref, bo_ref, ln1g_ref, ln1b_ref,
                      wi_ref, bi_ref, wo2_ref, bo2_ref, ln2g_ref, ln2b_ref,
                      wp_ref, bp_ref, wr_ref, br_ref,
                      out_ref, hid_ref):
    layer = pl.program_id(0)

    # --- first grid step: embedding LayerNorm into the resident hidden state ---
    @pl.when(layer == 0)
    def _():
        hid_ref[...] = _layer_norm(emb_ref[...], embg_ref[...], embb_ref[...])

    x = hid_ref[...]                                    # (B*S, H) f32, VMEM-resident
    x_bf = x.astype(jnp.bfloat16)

    # --- fused QKV projection: one (B*S, H) @ (H, 3H) MXU matmul, f32 accumulate ---
    qkv = (jnp.dot(x_bf, wqkv_ref[0], preferred_element_type=jnp.float32)
           + bqkv_ref[0])                               # (B*S, 3H) f32
    q = qkv[:, 0 * HIDDEN:1 * HIDDEN].reshape(BATCH, SEQ, HIDDEN)
    k = qkv[:, 1 * HIDDEN:2 * HIDDEN].reshape(BATCH, SEQ, HIDDEN)
    v = qkv[:, 2 * HIDDEN:3 * HIDDEN].reshape(BATCH, SEQ, HIDDEN)

    # Mask broadcast hoisted out of the head loop (JAX does not CSE broadcasts).
    mask_bss = jnp.broadcast_to(mask_ref[...], (BATCH, SEQ, SEQ))   # (B, S, S)

    wo_all = wo_ref[0]                                  # (H, H) bf16
    scale = 1.0 / math.sqrt(HEAD_DIM)

    # --- multi-head self-attention, batched over B via 3-D einsums.  The output
    #     projection is folded into the (static, tiny) head loop:
    #         attn = sum_h ctx_h @ Wo[h*HD:(h+1)*HD, :]
    #     which avoids any lane-axis concatenate and any materialized k.T.
    attn = jnp.zeros((BATCH * SEQ, HIDDEN), jnp.float32)
    for h in range(NUM_HEADS):                          # NUM_HEADS is small: unroll
        sl = slice(h * HEAD_DIM, (h + 1) * HEAD_DIM)
        qh = q[:, :, sl].astype(jnp.bfloat16)           # (B, S, HD)
        kh = k[:, :, sl].astype(jnp.bfloat16)
        vh = v[:, :, sl].astype(jnp.bfloat16)
        s_h = jnp.einsum('bqd,bkd->bqk', qh, kh,
                         preferred_element_type=jnp.float32) * scale   # (B, S, S)
        p_h = _softmax_last(s_h + mask_bss)             # f32; fully-masked rows -> uniform (BERT behavior)
        ctx = jnp.einsum('bqk,bkd->bqd', p_h.astype(jnp.bfloat16), vh,
                         preferred_element_type=jnp.float32)            # (B, S, HD)
        attn = attn + jnp.dot(
            ctx.reshape(BATCH * SEQ, HEAD_DIM).astype(jnp.bfloat16),
            wo_all[sl, :], preferred_element_type=jnp.float32)
    attn = attn + bo_ref[0]

    h1 = _layer_norm(attn + x, ln1g_ref[0], ln1b_ref[0])

    # --- feed-forward (GELU) ---
    inter = (jnp.dot(h1.astype(jnp.bfloat16), wi_ref[0],
                     preferred_element_type=jnp.float32) + bi_ref[0])
    inter = _gelu_exact(inter)
    ffn = (jnp.dot(inter.astype(jnp.bfloat16), wo2_ref[0],
                   preferred_element_type=jnp.float32) + bo2_ref[0])
    new_hidden = _layer_norm(ffn + h1, ln2g_ref[0], ln2b_ref[0])
    hid_ref[...] = new_hidden

    # --- last grid step: fused BERT pooler (tanh) + regressor head epilogue ---
    @pl.when(layer == pl.num_programs(0) - 1)
    def _():
        cls = new_hidden.reshape(BATCH, SEQ, HIDDEN)[:, 0, :]          # (B, H) CLS token
        pooled = jnp.tanh(
            jnp.dot(cls.astype(jnp.bfloat16), wp_ref[...],
                    preferred_element_type=jnp.float32) + bp_ref[...])
        # Regressor = Dropout(0.2) (identity at inference) + Linear(H -> 1),
        # implemented as a VPU lane reduction instead of an N=1 MXU matmul.
        out_ref[...] = (jnp.sum(pooled * wr_ref[...], axis=-1, keepdims=True)
                        + br_ref[...])


# ------------------------------ pallas_call wrapper ----------------------------
def bert_regressor_forward(input_ids, attention_masks, p):
    B, S = input_ids.shape
    # Glue (plain JAX): embedding gather + additive attention mask construction.
    emb = (jnp.take(p["word_emb"], input_ids, axis=0)
           + p["pos_emb"][:S][None, :, :]
           + p["type_emb"][0][None, None, :])
    emb = emb.reshape(B * S, HIDDEN).astype(jnp.float32)
    # 0 where attended, -10000 where masked; broadcast over heads & query axis in-kernel.
    add_mask = ((1.0 - attention_masks.astype(jnp.float32)) * -10000.0)[:, None, :]

    layer_ws = (p["wqkv"], p["bqkv"], p["wo"], p["bo"], p["ln1_g"], p["ln1_b"],
                p["wi"], p["bi"], p["wo2"], p["bo2"], p["ln2_g"], p["ln2_b"])

    def const_spec(shape):                 # resident across all layer steps
        nd = len(shape)
        return pl.BlockSpec(shape, lambda l, _nd=nd: (0,) * _nd)

    def layer_spec(arr):                   # layer l block -> prefetch of layer l+1
        _, d0, d1 = arr.shape
        return pl.BlockSpec((1, d0, d1), lambda l: (l, 0, 0))

    in_specs = ([const_spec(emb.shape), const_spec(add_mask.shape),
                 const_spec(p["emb_ln_g"].shape), const_spec(p["emb_ln_b"].shape)]
                + [layer_spec(w) for w in layer_ws]
                + [const_spec(p["pooler_w"].shape), const_spec(p["pooler_b"].shape),
                   const_spec(p["reg_w"].shape), const_spec(p["reg_b"].shape)])

    # TODO(synk): at full BERT size (H=768, I=3072) add a "parallel" batch/seq-tile
    # grid axis and tile the FFN along INTERMEDIATE to fit v7x's 64 MiB VMEM.
    return pl.pallas_call(
        bert_fused_kernel,
        out_shape=jax.ShapeDtypeStruct((B, 1), jnp.float32),
        grid_spec=pltpu.PrefetchScalarGridSpec(
            num_scalar_prefetch=0,
            grid=(NUM_LAYERS,),
            in_specs=in_specs,
            out_specs=pl.BlockSpec((B, 1), lambda l: (0, 0)),
            scratch_shapes=[pltpu.VMEM((B * S, HIDDEN), jnp.float32)],
        ),
        compiler_params=pltpu.CompilerParams(
            dimension_semantics=("arbitrary",),     # layers carry state sequentially
            vmem_limit_bytes=32 * 1024 * 1024,
        ),
    )(emb, add_mask, p["emb_ln_g"], p["emb_ln_b"], *layer_ws,
      p["pooler_w"], p["pooler_b"], p["reg_w"], p["reg_b"])


# ------------------------------ parameter init --------------------------------
def init_params(key):
    keys = iter(jax.random.split(key, 64))

    def dense(shape, dtype=jnp.bfloat16):
        w = 0.02 * jax.random.normal(next(keys), shape, dtype=jnp.float32)
        return w.astype(dtype)

    p = {
        "word_emb": dense((VOCAB, HIDDEN), jnp.float32),
        "pos_emb": dense((MAX_POS, HIDDEN), jnp.float32),
        "type_emb": dense((TYPE_VOCAB, HIDDEN), jnp.float32),
        "emb_ln_g": jnp.ones((1, HIDDEN), jnp.float32),
        "emb_ln_b": jnp.zeros((1, HIDDEN), jnp.float32),
        "pooler_w": dense((HIDDEN, HIDDEN)),                       # bf16
        "pooler_b": jnp.zeros((1, HIDDEN), jnp.float32),
        "reg_w": dense((1, HIDDEN), jnp.float32),                  # row vector (lane reduce)
        "reg_b": jnp.zeros((1, 1), jnp.float32),
    }
    # Per-layer weights stacked along a leading L axis (bf16 matmul weights,
    # f32 biases / LayerNorm params) so one pallas_call pipelines them per layer.
    wqkv, wo, wi, wo2 = [], [], [], []
    for _ in range(NUM_LAYERS):
        wqkv.append(dense((HIDDEN, 3 * HIDDEN)))   # fused [Wq | Wk | Wv]
        wo.append(dense((HIDDEN, HIDDEN)))
        wi.append(dense((HIDDEN, INTERMEDIATE)))
        wo2.append(dense((INTERMEDIATE, HIDDEN)))
    p["wqkv"] = jnp.stack(wqkv)
    p["bqkv"] = jnp.zeros((NUM_LAYERS, 1, 3 * HIDDEN), jnp.float32)
    p["wo"] = jnp.stack(wo)
    p["bo"] = jnp.zeros((NUM_LAYERS, 1, HIDDEN), jnp.float32)
    p["ln1_g"] = jnp.ones((NUM_LAYERS, 1, HIDDEN), jnp.float32)
    p["ln1_b"] = jnp.zeros((NUM_LAYERS, 1, HIDDEN), jnp.float32)
    p["wi"] = jnp.stack(wi)
    p["bi"] = jnp.zeros((NUM_LAYERS, 1, INTERMEDIATE), jnp.float32)
    p["wo2"] = jnp.stack(wo2)
    p["bo2"] = jnp.zeros((NUM_LAYERS, 1, HIDDEN), jnp.float32)
    p["ln2_g"] = jnp.ones((NUM_LAYERS, 1, HIDDEN), jnp.float32)
    p["ln2_b"] = jnp.zeros((NUM_LAYERS, 1, HIDDEN), jnp.float32)
    return p


# ------------------------------------ main -------------------------------------
if __name__ == "__main__":
    key = jax.random.PRNGKey(0)
    k_ids, k_params = jax.random.split(key)

    input_ids = jax.random.randint(k_ids, (BATCH, SEQ), 0, VOCAB, dtype=jnp.int32)
    attention_masks = jnp.ones((BATCH, SEQ), dtype=jnp.float32)
    attention_masks = attention_masks.at[1, 6:].set(0.0)   # exercise padding mask

    params = init_params(k_params)

    out = jax.jit(bert_regressor_forward)(input_ids, attention_masks, params)
    out = jax.block_until_ready(out)
    assert out.shape == (BATCH, 1) and out.dtype == jnp.float32
    assert bool(jnp.all(jnp.isfinite(out)))

    print("KERNEL_OK")
</pallas_src>

<mosaic_0001>
module attributes {stable_mosaic.version = 11 : i64} {
  func.func @bert_fused_kernel(%arg0: i32, %arg1: memref<16x32xf32, #tpu.memory_space<vmem>>, %arg2: memref<2x1x8xf32, #tpu.memory_space<vmem>>, %arg3: memref<1x32xf32, #tpu.memory_space<vmem>>, %arg4: memref<1x32xf32, #tpu.memory_space<vmem>>, %arg5: memref<1x32x96xbf16, #tpu.memory_space<vmem>>, %arg6: memref<1x1x96xf32, #tpu.memory_space<vmem>>, %arg7: memref<1x32x32xbf16, #tpu.memory_space<vmem>>, %arg8: memref<1x1x32xf32, #tpu.memory_space<vmem>>, %arg9: memref<1x1x32xf32, #tpu.memory_space<vmem>>, %arg10: memref<1x1x32xf32, #tpu.memory_space<vmem>>, %arg11: memref<1x32x64xbf16, #tpu.memory_space<vmem>>, %arg12: memref<1x1x64xf32, #tpu.memory_space<vmem>>, %arg13: memref<1x64x32xbf16, #tpu.memory_space<vmem>>, %arg14: memref<1x1x32xf32, #tpu.memory_space<vmem>>, %arg15: memref<1x1x32xf32, #tpu.memory_space<vmem>>, %arg16: memref<1x1x32xf32, #tpu.memory_space<vmem>>, %arg17: memref<32x32xbf16, #tpu.memory_space<vmem>>, %arg18: memref<1x32xf32, #tpu.memory_space<vmem>>, %arg19: memref<1x32xf32, #tpu.memory_space<vmem>>, %arg20: memref<1x1xf32, #tpu.memory_space<vmem>>, %arg21: memref<2x1xf32, #tpu.memory_space<vmem>>, %arg22: memref<16x32xf32, #tpu.memory_space<vmem>>) attributes {dimension_semantics = [#tpu.dimension_semantics<arbitrary>], iteration_bounds = array<i64: 2>, scalar_prefetch = 0 : i64, scratch_operands = 1 : i64, tpu.core_type = #tpu.core_type<tc>, window_params = [{pipeline_mode = #tpu.pipeline_mode<synchronous>, transform_indices = @transform_0, window_bounds = array<i64: 16, 32>}, {pipeline_mode = #tpu.pipeline_mode<synchronous>, transform_indices = @transform_1, window_bounds = array<i64: 2, 1, 8>}, {pipeline_mode = #tpu.pipeline_mode<synchronous>, transform_indices = @transform_2, window_bounds = array<i64: 1, 32>}, {pipeline_mode = #tpu.pipeline_mode<synchronous>, transform_indices = @transform_3, window_bounds = array<i64: 1, 32>}, {transform_indices = @transform_4, window_bounds = array<i64: 1, 32, 96>}, {transform_indices = @transform_5, window_bounds = array<i64: 1, 1, 96>}, {transform_indices = @transform_6, window_bounds = array<i64: 1, 32, 32>}, {transform_indices = @transform_7, window_bounds = array<i64: 1, 1, 32>}, {transform_indices = @transform_8, window_bounds = array<i64: 1, 1, 32>}, {transform_indices = @transform_9, window_bounds = array<i64: 1, 1, 32>}, {transform_indices = @transform_10, window_bounds = array<i64: 1, 32, 64>}, {transform_indices = @transform_11, window_bounds = array<i64: 1, 1, 64>}, {transform_indices = @transform_12, window_bounds = array<i64: 1, 64, 32>}, {transform_indices = @transform_13, window_bounds = array<i64: 1, 1, 32>}, {transform_indices = @transform_14, window_bounds = array<i64: 1, 1, 32>}, {transform_indices = @transform_15, window_bounds = array<i64: 1, 1, 32>}, {pipeline_mode = #tpu.pipeline_mode<synchronous>, transform_indices = @transform_16, window_bounds = array<i64: 32, 32>}, {pipeline_mode = #tpu.pipeline_mode<synchronous>, transform_indices = @transform_17, window_bounds = array<i64: 1, 32>}, {pipeline_mode = #tpu.pipeline_mode<synchronous>, transform_indices = @transform_18, window_bounds = array<i64: 1, 32>}, {pipeline_mode = #tpu.pipeline_mode<synchronous>, transform_indices = @transform_19, window_bounds = array<i64: 1, 1>}, {pipeline_mode = #tpu.pipeline_mode<synchronous>, transform_indices = @transform_20, window_bounds = array<i64: 2, 1>}]} {
    %c0_i32 = arith.constant 0 : i32
    %0 = arith.cmpi eq, %arg0, %c0_i32 : i32
    %1 = arith.extui %0 : i1 to i32
    %c0_i32_0 = arith.constant 0 : i32
    %2 = arith.cmpi ne, %1, %c0_i32_0 : i32
    scf.if %2 {
      %c0_72 = arith.constant 0 : index
      %c0_73 = arith.constant 0 : index
      %164 = vector.load %arg1[%c0_72, %c0_73] : memref<16x32xf32, #tpu.memory_space<vmem>>, vector<16x32xf32>
      %c0_74 = arith.constant 0 : index
      %c0_75 = arith.constant 0 : index
      %165 = vector.load %arg3[%c0_74, %c0_75] : memref<1x32xf32, #tpu.memory_space<vmem>>, vector<1x32xf32>
      %c0_76 = arith.constant 0 : index
      %c0_77 = arith.constant 0 : index
      %166 = vector.load %arg4[%c0_76, %c0_77] : memref<1x32xf32, #tpu.memory_space<vmem>>, vector<1x32xf32>
      %cst_78 = arith.constant dense<0.000000e+00> : vector<16xf32>
      %167 = vector.multi_reduction <add>, %164, %cst_78 [1] : vector<16x32xf32> to vector<16xf32>
      %168 = vector.shape_cast %167 : vector<16xf32> to vector<16x1xf32>
      %cst_79 = arith.constant 3.200000e+01 : f32
      %169 = vector.broadcast %cst_79 : f32 to vector<16x1xf32>
      %170 = arith.divf %168, %169 : vector<16x1xf32>
      %171 = vector.broadcast %170 : vector<16x1xf32> to vector<16x32xf32>
      %172 = arith.subf %164, %171 : vector<16x32xf32>
      %173 = arith.mulf %172, %172 : vector<16x32xf32>
      %cst_80 = arith.constant dense<0.000000e+00> : vector<16xf32>
      %174 = vector.multi_reduction <add>, %173, %cst_80 [1] : vector<16x32xf32> to vector<16xf32>
      %175 = vector.shape_cast %174 : vector<16xf32> to vector<16x1xf32>
      %cst_81 = arith.constant 3.200000e+01 : f32
      %176 = vector.broadcast %cst_81 : f32 to vector<16x1xf32>
      %177 = arith.divf %175, %176 : vector<16x1xf32>
      %178 = vector.broadcast %170 : vector<16x1xf32> to vector<16x32xf32>
      %179 = arith.subf %164, %178 : vector<16x32xf32>
      %cst_82 = arith.constant 9.99999996E-13 : f32
      %180 = vector.broadcast %cst_82 : f32 to vector<16x1xf32>
      %181 = arith.addf %177, %180 : vector<16x1xf32>
      %182 = math.rsqrt %181 : vector<16x1xf32>
      %183 = vector.broadcast %182 : vector<16x1xf32> to vector<16x32xf32>
      %184 = arith.mulf %179, %183 : vector<16x32xf32>
      %185 = vector.broadcast %165 : vector<1x32xf32> to vector<16x32xf32>
      %186 = arith.mulf %184, %185 : vector<16x32xf32>
      %187 = vector.broadcast %166 : vector<1x32xf32> to vector<16x32xf32>
      %188 = arith.addf %186, %187 : vector<16x32xf32>
      %c0_83 = arith.constant 0 : index
      %c0_84 = arith.constant 0 : index
      %189 = vector.load %arg22[%c0_83, %c0_84] : memref<16x32xf32, #tpu.memory_space<vmem>>, vector<16x32xf32>
      tpu.vector_store %arg22[%c0_83, %c0_84], %188 {strides = array<i32>} : memref<16x32xf32, #tpu.memory_space<vmem>>, vector<16x32xf32>,
    } else {
    }
    %c0 = arith.constant 0 : index
    %c0_1 = arith.constant 0 : index
    %3 = vector.load %arg22[%c0, %c0_1] : memref<16x32xf32, #tpu.memory_space<vmem>>, vector<16x32xf32>
    %4 = arith.truncf %3 : vector<16x32xf32> to vector<16x32xbf16>
    %c0_2 = arith.constant 0 : index
    %c0_3 = arith.constant 0 : index
    %c0_4 = arith.constant 0 : index
    %5 = vector.load %arg5[%c0_2, %c0_3, %c0_4] : memref<1x32x96xbf16, #tpu.memory_space<vmem>>, vector<1x32x96xbf16>
    %6 = vector.shape_cast %5 : vector<1x32x96xbf16> to vector<32x96xbf16>
    %cst = arith.constant dense<0.000000e+00> : vector<16x96xf32>
    %7 = tpu.matmul %4, %6, %cst {dimension_numbers = #tpu.dot_dimension_numbers<[1], [0], [0], [1], [0, 0, 1, 1], [], []>} : vector<16x32xbf16>, vector<32x96xbf16>, vector<16x96xf32> -> vector<16x96xf32>
    %c0_5 = arith.constant 0 : index
    %c0_6 = arith.constant 0 : index
    %c0_7 = arith.constant 0 : index
    %8 = vector.load %arg6[%c0_5, %c0_6, %c0_7] : memref<1x1x96xf32, #tpu.memory_space<vmem>>, vector<1x1x96xf32>
    %9 = vector.shape_cast %8 : vector<1x1x96xf32> to vector<1x96xf32>
    %10 = vector.broadcast %9 : vector<1x96xf32> to vector<16x96xf32>
    %11 = arith.addf %7, %10 : vector<16x96xf32>
    %12 = vector.extract_strided_slice %11 {offsets = [0, 0], sizes = [16, 32], strides = [1, 1]} : vector<16x96xf32> to vector<16x32xf32>
    %13 = vector.shape_cast %12 : vector<16x32xf32> to vector<2x8x32xf32>
    %14 = vector.extract_strided_slice %11 {offsets = [0, 32], sizes = [16, 32], strides = [1, 1]} : vector<16x96xf32> to vector<16x32xf32>
    %15 = vector.shape_cast %14 : vector<16x32xf32> to vector<2x8x32xf32>
    %16 = vector.extract_strided_slice %11 {offsets = [0, 64], sizes = [16, 32], strides = [1, 1]} : vector<16x96xf32> to vector<16x32xf32>
    %17 = vector.shape_cast %16 : vector<16x32xf32> to vector<2x8x32xf32>
    %c0_8 = arith.constant 0 : index
    %c0_9 = arith.constant 0 : index
    %c0_10 = arith.constant 0 : index
    %18 = vector.load %arg2[%c0_8, %c0_9, %c0_10] : memref<2x1x8xf32, #tpu.memory_space<vmem>>, vector<2x1x8xf32>
    %19 = vector.shape_cast %18 : vector<2x1x8xf32> to vector<2x1x8xf32>
    %20 = vector.broadcast %19 : vector<2x1x8xf32> to vector<2x8x8xf32>
    %c0_11 = arith.constant 0 : index
    %c0_12 = arith.constant 0 : index
    %c0_13 = arith.constant 0 : index
    %21 = vector.load %arg7[%c0_11, %c0_12, %c0_13] : memref<1x32x32xbf16, #tpu.memory_space<vmem>>, vector<1x32x32xbf16>
    %22 = vector.shape_cast %21 : vector<1x32x32xbf16> to vector<32x32xbf16>
    %cst_14 = arith.constant 0.000000e+00 : f32
    %23 = vector.broadcast %cst_14 : f32 to vector<16x32xf32>
    %24 = vector.extract_strided_slice %13 {offsets = [0, 0, 0], sizes = [2, 8, 16], strides = [1, 1, 1]} : vector<2x8x32xf32> to vector<2x8x16xf32>
    %25 = arith.truncf %24 : vector<2x8x16xf32> to vector<2x8x16xbf16>
    %26 = vector.extract_strided_slice %15 {offsets = [0, 0, 0], sizes = [2, 8, 16], strides = [1, 1, 1]} : vector<2x8x32xf32> to vector<2x8x16xf32>
    %27 = arith.truncf %26 : vector<2x8x16xf32> to vector<2x8x16xbf16>
    %28 = vector.extract_strided_slice %17 {offsets = [0, 0, 0], sizes = [2, 8, 16], strides = [1, 1, 1]} : vector<2x8x32xf32> to vector<2x8x16xf32>
    %29 = arith.truncf %28 : vector<2x8x16xf32> to vector<2x8x16xbf16>
    "tpu.trace_start"() <{level = 10 : i32, message = "bqd,bkd->bqk"}> : () -> ()
    %cst_15 = arith.constant dense<0.000000e+00> : vector<2x8x8xf32>
    %30 = tpu.matmul %25, %27, %cst_15 {dimension_numbers = #tpu.dot_dimension_numbers<[2], [2], [1], [1], [0, 0, 0, 1, 1, 1], [0], [0]>} : vector<2x8x16xbf16>, vector<2x8x16xbf16>, vector<2x8x8xf32> -> vector<2x8x8xf32>
    "tpu.trace_stop"() : () -> ()
    %cst_16 = arith.constant 2.500000e-01 : f32
    %31 = vector.broadcast %cst_16 : f32 to vector<2x8x8xf32>
    %32 = arith.mulf %30, %31 : vector<2x8x8xf32>
    %33 = arith.addf %32, %20 : vector<2x8x8xf32>
    %cst_17 = arith.constant dense<0xFF800000> : vector<2x8xf32>
    %34 = vector.multi_reduction <maximumf>, %33, %cst_17 [2] : vector<2x8x8xf32> to vector<2x8xf32>
    %35 = vector.shape_cast %34 : vector<2x8xf32> to vector<2x8x1xf32>
    %36 = vector.broadcast %35 : vector<2x8x1xf32> to vector<2x8x8xf32>
    %37 = arith.subf %33, %36 : vector<2x8x8xf32>
    %38 = math.exp %37 : vector<2x8x8xf32>
    %cst_18 = arith.constant dense<0.000000e+00> : vector<2x8xf32>
    %39 = vector.multi_reduction <add>, %38, %cst_18 [2] : vector<2x8x8xf32> to vector<2x8xf32>
    %40 = vector.shape_cast %39 : vector<2x8xf32> to vector<2x8x1xf32>
    %41 = tpu.reciprocal %40 {approx = true} : vector<2x8x1xf32> -> vector<2x8x1xf32>
    %42 = vector.broadcast %41 : vector<2x8x1xf32> to vector<2x8x8xf32>
    %43 = arith.mulf %38, %42 : vector<2x8x8xf32>
    %44 = arith.truncf %43 : vector<2x8x8xf32> to vector<2x8x8xbf16>
    "tpu.trace_start"() <{level = 10 : i32, message = "bqk,bkd->bqd"}> : () -> ()
    %cst_19 = arith.constant dense<0.000000e+00> : vector<2x8x16xf32>
    %45 = tpu.matmul %44, %29, %cst_19 {dimension_numbers = #tpu.dot_dimension_numbers<[2], [1], [1], [2], [0, 0, 0, 1, 1, 2], [0], [0]>} : vector<2x8x8xbf16>, vector<2x8x16xbf16>, vector<2x8x16xf32> -> vector<2x8x16xf32>
    "tpu.trace_stop"() : () -> ()
    %46 = vector.shape_cast %45 : vector<2x8x16xf32> to vector<16x16xf32>
    %47 = arith.truncf %46 : vector<16x16xf32> to vector<16x16xbf16>
    %48 = vector.extract_strided_slice %22 {offsets = [0, 0], sizes = [16, 32], strides = [1, 1]} : vector<32x32xbf16> to vector<16x32xbf16>
    %cst_20 = arith.constant dense<0.000000e+00> : vector<16x32xf32>
    %49 = tpu.matmul %47, %48, %cst_20 {dimension_numbers = #tpu.dot_dimension_numbers<[1], [0], [0], [1], [0, 0, 1, 1], [], []>} : vector<16x16xbf16>, vector<16x32xbf16>, vector<16x32xf32> -> vector<16x32xf32>
    %50 = arith.addf %23, %49 : vector<16x32xf32>
    %51 = vector.extract_strided_slice %13 {offsets = [0, 0, 16], sizes = [2, 8, 16], strides = [1, 1, 1]} : vector<2x8x32xf32> to vector<2x8x16xf32>
    %52 = arith.truncf %51 : vector<2x8x16xf32> to vector<2x8x16xbf16>
    %53 = vector.extract_strided_slice %15 {offsets = [0, 0, 16], sizes = [2, 8, 16], strides = [1, 1, 1]} : vector<2x8x32xf32> to vector<2x8x16xf32>
    %54 = arith.truncf %53 : vector<2x8x16xf32> to vector<2x8x16xbf16>
    %55 = vector.extract_strided_slice %17 {offsets = [0, 0, 16], sizes = [2, 8, 16], strides = [1, 1, 1]} : vector<2x8x32xf32> to vector<2x8x16xf32>
    %56 = arith.truncf %55 : vector<2x8x16xf32> to vector<2x8x16xbf16>
    "tpu.trace_start"() <{level = 10 : i32, message = "bqd,bkd->bqk"}> : () -> ()
    %cst_21 = arith.constant dense<0.000000e+00> : vector<2x8x8xf32>
    %57 = tpu.matmul %52, %54, %cst_21 {dimension_numbers = #tpu.dot_dimension_numbers<[2], [2], [1], [1], [0, 0, 0, 1, 1, 1], [0], [0]>} : vector<2x8x16xbf16>, vector<2x8x16xbf16>, vector<2x8x8xf32> -> vector<2x8x8xf32>
    "tpu.trace_stop"() : () -> ()
    %cst_22 = arith.constant 2.500000e-01 : f32
    %58 = vector.broadcast %cst_22 : f32 to vector<2x8x8xf32>
    %59 = arith.mulf %57, %58 : vector<2x8x8xf32>
    %60 = arith.addf %59, %20 : vector<2x8x8xf32>
    %cst_23 = arith.constant dense<0xFF800000> : vector<2x8xf32>
    %61 = vector.multi_reduction <maximumf>, %60, %cst_23 [2] : vector<2x8x8xf32> to vector<2x8xf32>
    %62 = vector.shape_cast %61 : vector<2x8xf32> to vector<2x8x1xf32>
    %63 = vector.broadcast %62 : vector<2x8x1xf32> to vector<2x8x8xf32>
    %64 = arith.subf %60, %63 : vector<2x8x8xf32>
    %65 = math.exp %64 : vector<2x8x8xf32>
    %cst_24 = arith.constant dense<0.000000e+00> : vector<2x8xf32>
    %66 = vector.multi_reduction <add>, %65, %cst_24 [2] : vector<2x8x8xf32> to vector<2x8xf32>
    %67 = vector.shape_cast %66 : vector<2x8xf32> to vector<2x8x1xf32>
    %68 = tpu.reciprocal %67 {approx = true} : vector<2x8x1xf32> -> vector<2x8x1xf32>
    %69 = vector.broadcast %68 : vector<2x8x1xf32> to vector<2x8x8xf32>
    %70 = arith.mulf %65, %69 : vector<2x8x8xf32>
    %71 = arith.truncf %70 : vector<2x8x8xf32> to vector<2x8x8xbf16>
    "tpu.trace_start"() <{level = 10 : i32, message = "bqk,bkd->bqd"}> : () -> ()
    %cst_25 = arith.constant dense<0.000000e+00> : vector<2x8x16xf32>
    %72 = tpu.matmul %71, %56, %cst_25 {dimension_numbers = #tpu.dot_dimension_numbers<[2], [1], [1], [2], [0, 0, 0, 1, 1, 2], [0], [0]>} : vector<2x8x8xbf16>, vector<2x8x16xbf16>, vector<2x8x16xf32> -> vector<2x8x16xf32>
    "tpu.trace_stop"() : () -> ()
    %73 = vector.shape_cast %72 : vector<2x8x16xf32> to vector<16x16xf32>
    %74 = arith.truncf %73 : vector<16x16xf32> to vector<16x16xbf16>
    %75 = vector.extract_strided_slice %22 {offsets = [16, 0], sizes = [16, 32], strides = [1, 1]} : vector<32x32xbf16> to vector<16x32xbf16>
    %cst_26 = arith.constant dense<0.000000e+00> : vector<16x32xf32>
    %76 = tpu.matmul %74, %75, %cst_26 {dimension_numbers = #tpu.dot_dimension_numbers<[1], [0], [0], [1], [0, 0, 1, 1], [], []>} : vector<16x16xbf16>, vector<16x32xbf16>, vector<16x32xf32> -> vector<16x32xf32>
    %77 = arith.addf %50, %76 : vector<16x32xf32>
    %c0_27 = arith.constant 0 : index
    %c0_28 = arith.constant 0 : index
    %c0_29 = arith.constant 0 : index
    %78 = vector.load %arg8[%c0_27, %c0_28, %c0_29] : memref<1x1x32xf32, #tpu.memory_space<vmem>>, vector<1x1x32xf32>
    %79 = vector.shape_cast %78 : vector<1x1x32xf32> to vector<1x32xf32>
    %80 = vector.broadcast %79 : vector<1x32xf32> to vector<16x32xf32>
    %81 = arith.addf %77, %80 : vector<16x32xf32>
    %82 = arith.addf %81, %3 : vector<16x32xf32>
    %c0_30 = arith.constant 0 : index
    %c0_31 = arith.constant 0 : index
    %c0_32 = arith.constant 0 : index
    %83 = vector.load %arg9[%c0_30, %c0_31, %c0_32] : memref<1x1x32xf32, #tpu.memory_space<vmem>>, vector<1x1x32xf32>
    %84 = vector.shape_cast %83 : vector<1x1x32xf32> to vector<1x32xf32>
    %c0_33 = arith.constant 0 : index
    %c0_34 = arith.constant 0 : index
    %c0_35 = arith.constant 0 : index
    %85 = vector.load %arg10[%c0_33, %c0_34, %c0_35] : memref<1x1x32xf32, #tpu.memory_space<vmem>>, vector<1x1x32xf32>
    %86 = vector.shape_cast %85 : vector<1x1x32xf32> to vector<1x32xf32>
    %cst_36 = arith.constant dense<0.000000e+00> : vector<16xf32>
    %87 = vector.multi_reduction <add>, %82, %cst_36 [1] : vector<16x32xf32> to vector<16xf32>
    %88 = vector.shape_cast %87 : vector<16xf32> to vector<16x1xf32>
    %cst_37 = arith.constant 3.200000e+01 : f32
    %89 = vector.broadcast %cst_37 : f32 to vector<16x1xf32>
    %90 = arith.divf %88, %89 : vector<16x1xf32>
    %91 = vector.broadcast %90 : vector<16x1xf32> to vector<16x32xf32>
    %92 = arith.subf %82, %91 : vector<16x32xf32>
    %93 = arith.mulf %92, %92 : vector<16x32xf32>
    %cst_38 = arith.constant dense<0.000000e+00> : vector<16xf32>
    %94 = vector.multi_reduction <add>, %93, %cst_38 [1] : vector<16x32xf32> to vector<16xf32>
    %95 = vector.shape_cast %94 : vector<16xf32> to vector<16x1xf32>
    %cst_39 = arith.constant 3.200000e+01 : f32
    %96 = vector.broadcast %cst_39 : f32 to vector<16x1xf32>
    %97 = arith.divf %95, %96 : vector<16x1xf32>
    %98 = vector.broadcast %90 : vector<16x1xf32> to vector<16x32xf32>
    %99 = arith.subf %82, %98 : vector<16x32xf32>
    %cst_40 = arith.constant 9.99999996E-13 : f32
    %100 = vector.broadcast %cst_40 : f32 to vector<16x1xf32>
    %101 = arith.addf %97, %100 : vector<16x1xf32>
    %102 = math.rsqrt %101 : vector<16x1xf32>
    %103 = vector.broadcast %102 : vector<16x1xf32> to vector<16x32xf32>
    %104 = arith.mulf %99, %103 : vector<16x32xf32>
    %105 = vector.broadcast %84 : vector<1x32xf32> to vector<16x32xf32>
    %106 = arith.mulf %104, %105 : vector<16x32xf32>
    %107 = vector.broadcast %86 : vector<1x32xf32> to vector<16x32xf32>
    %108 = arith.addf %106, %107 : vector<16x32xf32>
    %109 = arith.truncf %108 : vector<16x32xf32> to vector<16x32xbf16>
    %c0_41 = arith.constant 0 : index
    %c0_42 = arith.constant 0 : index
    %c0_43 = arith.constant 0 : index
    %110 = vector.load %arg11[%c0_41, %c0_42, %c0_43] : memref<1x32x64xbf16, #tpu.memory_space<vmem>>, vector<1x32x64xbf16>
    %111 = vector.shape_cast %110 : vector<1x32x64xbf16> to vector<32x64xbf16>
    %cst_44 = arith.constant dense<0.000000e+00> : vector<16x64xf32>
    %112 = tpu.matmul %109, %111, %cst_44 {dimension_numbers = #tpu.dot_dimension_numbers<[1], [0], [0], [1], [0, 0, 1, 1], [], []>} : vector<16x32xbf16>, vector<32x64xbf16>, vector<16x64xf32> -> vector<16x64xf32>
    %c0_45 = arith.constant 0 : index
    %c0_46 = arith.constant 0 : index
    %c0_47 = arith.constant 0 : index
    %113 = vector.load %arg12[%c0_45, %c0_46, %c0_47] : memref<1x1x64xf32, #tpu.memory_space<vmem>>, vector<1x1x64xf32>
    %114 = vector.shape_cast %113 : vector<1x1x64xf32> to vector<1x64xf32>
    %115 = vector.broadcast %114 : vector<1x64xf32> to vector<16x64xf32>
    %116 = arith.addf %112, %115 : vector<16x64xf32>
    %cst_48 = arith.constant 5.000000e-01 : f32
    %117 = vector.broadcast %cst_48 : f32 to vector<16x64xf32>
    %118 = arith.mulf %117, %116 : vector<16x64xf32>
    %cst_49 = arith.constant 0.707106769 : f32
    %119 = vector.broadcast %cst_49 : f32 to vector<16x64xf32>
    %120 = arith.mulf %116, %119 : vector<16x64xf32>
    %121 = math.erf %120 : vector<16x64xf32>
    %cst_50 = arith.constant 1.000000e+00 : f32
    %122 = vector.broadcast %cst_50 : f32 to vector<16x64xf32>
    %123 = arith.addf %122, %121 : vector<16x64xf32>
    %124 = arith.mulf %118, %123 : vector<16x64xf32>
    %125 = arith.truncf %124 : vector<16x64xf32> to vector<16x64xbf16>
    %c0_51 = arith.constant 0 : index
    %c0_52 = arith.constant 0 : index
    %c0_53 = arith.constant 0 : index
    %126 = vector.load %arg13[%c0_51, %c0_52, %c0_53] : memref<1x64x32xbf16, #tpu.memory_space<vmem>>, vector<1x64x32xbf16>
    %127 = vector.shape_cast %126 : vector<1x64x32xbf16> to vector<64x32xbf16>
    %cst_54 = arith.constant dense<0.000000e+00> : vector<16x32xf32>
    %128 = tpu.matmul %125, %127, %cst_54 {dimension_numbers = #tpu.dot_dimension_numbers<[1], [0], [0], [1], [0, 0, 1, 1], [], []>} : vector<16x64xbf16>, vector<64x32xbf16>, vector<16x32xf32> -> vector<16x32xf32>
    %c0_55 = arith.constant 0 : index
    %c0_56 = arith.constant 0 : index
    %c0_57 = arith.constant 0 : index
    %129 = vector.load %arg14[%c0_55, %c0_56, %c0_57] : memref<1x1x32xf32, #tpu.memory_space<vmem>>, vector<1x1x32xf32>
    %130 = vector.shape_cast %129 : vector<1x1x32xf32> to vector<1x32xf32>
    %131 = vector.broadcast %130 : vector<1x32xf32> to vector<16x32xf32>
    %132 = arith.addf %128, %131 : vector<16x32xf32>
    %133 = arith.addf %132, %108 : vector<16x32xf32>
    %c0_58 = arith.constant 0 : index
    %c0_59 = arith.constant 0 : index
    %c0_60 = arith.constant 0 : index
    %134 = vector.load %arg15[%c0_58, %c0_59, %c0_60] : memref<1x1x32xf32, #tpu.memory_space<vmem>>, vector<1x1x32xf32>
    %135 = vector.shape_cast %134 : vector<1x1x32xf32> to vector<1x32xf32>
    %c0_61 = arith.constant 0 : index
    %c0_62 = arith.constant 0 : index
    %c0_63 = arith.constant 0 : index
    %136 = vector.load %arg16[%c0_61, %c0_62, %c0_63] : memref<1x1x32xf32, #tpu.memory_space<vmem>>, vector<1x1x32xf32>
    %137 = vector.shape_cast %136 : vector<1x1x32xf32> to vector<1x32xf32>
    %cst_64 = arith.constant dense<0.000000e+00> : vector<16xf32>
    %138 = vector.multi_reduction <add>, %133, %cst_64 [1] : vector<16x32xf32> to vector<16xf32>
    %139 = vector.shape_cast %138 : vector<16xf32> to vector<16x1xf32>
    %cst_65 = arith.constant 3.200000e+01 : f32
    %140 = vector.broadcast %cst_65 : f32 to vector<16x1xf32>
    %141 = arith.divf %139, %140 : vector<16x1xf32>
    %142 = vector.broadcast %141 : vector<16x1xf32> to vector<16x32xf32>
    %143 = arith.subf %133, %142 : vector<16x32xf32>
    %144 = arith.mulf %143, %143 : vector<16x32xf32>
    %cst_66 = arith.constant dense<0.000000e+00> : vector<16xf32>
    %145 = vector.multi_reduction <add>, %144, %cst_66 [1] : vector<16x32xf32> to vector<16xf32>
    %146 = vector.shape_cast %145 : vector<16xf32> to vector<16x1xf32>
    %cst_67 = arith.constant 3.200000e+01 : f32
    %147 = vector.broadcast %cst_67 : f32 to vector<16x1xf32>
    %148 = arith.divf %146, %147 : vector<16x1xf32>
    %149 = vector.broadcast %141 : vector<16x1xf32> to vector<16x32xf32>
    %150 = arith.subf %133, %149 : vector<16x32xf32>
    %cst_68 = arith.constant 9.99999996E-13 : f32
    %151 = vector.broadcast %cst_68 : f32 to vector<16x1xf32>
    %152 = arith.addf %148, %151 : vector<16x1xf32>
    %153 = math.rsqrt %152 : vector<16x1xf32>
    %154 = vector.broadcast %153 : vector<16x1xf32> to vector<16x32xf32>
    %155 = arith.mulf %150, %154 : vector<16x32xf32>
    %156 = vector.broadcast %135 : vector<1x32xf32> to vector<16x32xf32>
    %157 = arith.mulf %155, %156 : vector<16x32xf32>
    %158 = vector.broadcast %137 : vector<1x32xf32> to vector<16x32xf32>
    %159 = arith.addf %157, %158 : vector<16x32xf32>
    %c0_69 = arith.constant 0 : index
    %c0_70 = arith.constant 0 : index
    %160 = vector.load %arg22[%c0_69, %c0_70] : memref<16x32xf32, #tpu.memory_space<vmem>>, vector<16x32xf32>
    tpu.vector_store %arg22[%c0_69, %c0_70], %159 {strides = array<i32>} : memref<16x32xf32, #tpu.memory_space<vmem>>, vector<16x32xf32>,
    %c1_i32 = arith.constant 1 : i32
    %161 = arith.cmpi eq, %arg0, %c1_i32 : i32
    %162 = arith.extui %161 : i1 to i32
    %c0_i32_71 = arith.constant 0 : i32
    %163 = arith.cmpi ne, %162, %c0_i32_71 : i32
    scf.if %163 {
      %164 = vector.shape_cast %159 : vector<16x32xf32> to vector<2x8x32xf32>
      %165 = vector.extract_strided_slice %164 {offsets = [0, 0, 0], sizes = [2, 1, 32], strides = [1, 1, 1]} : vector<2x8x32xf32> to vector<2x1x32xf32>
      %166 = vector.shape_cast %165 : vector<2x1x32xf32> to vector<2x32xf32>
      %167 = arith.truncf %166 : vector<2x32xf32> to vector<2x32xbf16>
      %c0_72 = arith.constant 0 : index
      %c0_73 = arith.constant 0 : index
      %168 = vector.load %arg17[%c0_72, %c0_73] : memref<32x32xbf16, #tpu.memory_space<vmem>>, vector<32x32xbf16>
      %cst_74 = arith.constant dense<0.000000e+00> : vector<2x32xf32>
      %169 = tpu.matmul %167, %168, %cst_74 {dimension_numbers = #tpu.dot_dimension_numbers<[1], [0], [0], [1], [0, 0, 1, 1], [], []>} : vector<2x32xbf16>, vector<32x32xbf16>, vector<2x32xf32> -> vector<2x32xf32>
      %c0_75 = arith.constant 0 : index
      %c0_76 = arith.constant 0 : index
      %170 = vector.load %arg18[%c0_75, %c0_76] : memref<1x32xf32, #tpu.memory_space<vmem>>, vector<1x32xf32>
      %171 = vector.broadcast %170 : vector<1x32xf32> to vector<2x32xf32>
      %172 = arith.addf %169, %171 : vector<2x32xf32>
      %173 = math.tanh %172 : vector<2x32xf32>
      %c0_77 = arith.constant 0 : index
      %c0_78 = arith.constant 0 : index
      %174 = vector.load %arg19[%c0_77, %c0_78] : memref<1x32xf32, #tpu.memory_space<vmem>>, vector<1x32xf32>
      %175 = vector.broadcast %174 : vector<1x32xf32> to vector<2x32xf32>
      %176 = arith.mulf %173, %175 : vector<2x32xf32>
      %cst_79 = arith.constant dense<0.000000e+00> : vector<2xf32>
      %177 = vector.multi_reduction <add>, %176, %cst_79 [1] : vector<2x32xf32> to vector<2xf32>
      %178 = vector.shape_cast %177 : vector<2xf32> to vector<2x1xf32>
      %c0_80 = arith.constant 0 : index
      %c0_81 = arith.constant 0 : index
      %179 = vector.load %arg20[%c0_80, %c0_81] : memref<1x1xf32, #tpu.memory_space<vmem>>, vector<1x1xf32>
      %180 = vector.broadcast %179 : vector<1x1xf32> to vector<2x1xf32>
      %181 = arith.addf %178, %180 : vector<2x1xf32>
      %c0_82 = arith.constant 0 : index
      %c0_83 = arith.constant 0 : index
      %182 = vector.load %arg21[%c0_82, %c0_83] : memref<2x1xf32, #tpu.memory_space<vmem>>, vector<2x1xf32>
      tpu.vector_store %arg21[%c0_82, %c0_83], %181 {strides = array<i32>} : memref<2x1xf32, #tpu.memory_space<vmem>>, vector<2x1xf32>,
    } else {
    }
    return
  }
  func.func @transform_0(%arg0: i32) -> (i32, i32) {
    %c0_i32 = arith.constant 0 : i32
    %c0_i32_0 = arith.constant 0 : i32
    %c0_i32_1 = arith.constant 0 : i32
    return %c0_i32, %c0_i32_0 : i32, i32
  }
  func.func @transform_1(%arg0: i32) -> (i32, i32, i32) {
    %c0_i32 = arith.constant 0 : i32
    %c0_i32_0 = arith.constant 0 : i32
    %c0_i32_1 = arith.constant 0 : i32
    %c0_i32_2 = arith.constant 0 : i32
    return %c0_i32, %c0_i32_0, %c0_i32_1 : i32, i32, i32
  }
  func.func @transform_2(%arg0: i32) -> (i32, i32) {
    %c0_i32 = arith.constant 0 : i32
    %c0_i32_0 = arith.constant 0 : i32
    %c0_i32_1 = arith.constant 0 : i32
    return %c0_i32, %c0_i32_0 : i32, i32
  }
  func.func @transform_3(%arg0: i32) -> (i32, i32) {
    %c0_i32 = arith.constant 0 : i32
    %c0_i32_0 = arith.constant 0 : i32
    %c0_i32_1 = arith.constant 0 : i32
    return %c0_i32, %c0_i32_0 : i32, i32
  }
  func.func @transform_4(%arg0: i32) -> (i32, i32, i32) {
    %c0_i32 = arith.constant 0 : i32
    %c0_i32_0 = arith.constant 0 : i32
    %c0_i32_1 = arith.constant 0 : i32
    return %arg0, %c0_i32, %c0_i32_0 : i32, i32, i32
  }
  func.func @transform_5(%arg0: i32) -> (i32, i32, i32) {
    %c0_i32 = arith.constant 0 : i32
    %c0_i32_0 = arith.constant 0 : i32
    %c0_i32_1 = arith.constant 0 : i32
    return %arg0, %c0_i32, %c0_i32_0 : i32, i32, i32
  }
  func.func @transform_6(%arg0: i32) -> (i32, i32, i32) {
    %c0_i32 = arith.constant 0 : i32
    %c0_i32_0 = arith.constant 0 : i32
    %c0_i32_1 = arith.constant 0 : i32
    return %arg0, %c0_i32, %c0_i32_0 : i32, i32, i32
  }
  func.func @transform_7(%arg0: i32) -> (i32, i32, i32) {
    %c0_i32 = arith.constant 0 : i32
    %c0_i32_0 = arith.constant 0 : i32
    %c0_i32_1 = arith.constant 0 : i32
    return %arg0, %c0_i32, %c0_i32_0 : i32, i32, i32
  }
  func.func @transform_8(%arg0: i32) -> (i32, i32, i32) {
    %c0_i32 = arith.constant 0 : i32
    %c0_i32_0 = arith.constant 0 : i32
    %c0_i32_1 = arith.constant 0 : i32
    return %arg0, %c0_i32, %c0_i32_0 : i32, i32, i32
  }
  func.func @transform_9(%arg0: i32) -> (i32, i32, i32) {
    %c0_i32 = arith.constant 0 : i32
    %c0_i32_0 = arith.constant 0 : i32
    %c0_i32_1 = arith.constant 0 : i32
    return %arg0, %c0_i32, %c0_i32_0 : i32, i32, i32
  }
  func.func @transform_10(%arg0: i32) -> (i32, i32, i32) {
    %c0_i32 = arith.constant 0 : i32
    %c0_i32_0 = arith.constant 0 : i32
    %c0_i32_1 = arith.constant 0 : i32
    return %arg0, %c0_i32, %c0_i32_0 : i32, i32, i32
  }
  func.func @transform_11(%arg0: i32) -> (i32, i32, i32) {
    %c0_i32 = arith.constant 0 : i32
    %c0_i32_0 = arith.constant 0 : i32
    %c0_i32_1 = arith.constant 0 : i32
    return %arg0, %c0_i32, %c0_i32_0 : i32, i32, i32
  }
  func.func @transform_12(%arg0: i32) -> (i32, i32, i32) {
    %c0_i32 = arith.constant 0 : i32
    %c0_i32_0 = arith.constant 0 : i32
    %c0_i32_1 = arith.constant 0 : i32
    return %arg0, %c0_i32, %c0_i32_0 : i32, i32, i32
  }
  func.func @transform_13(%arg0: i32) -> (i32, i32, i32) {
    %c0_i32 = arith.constant 0 : i32
    %c0_i32_0 = arith.constant 0 : i32
    %c0_i32_1 = arith.constant 0 : i32
    return %arg0, %c0_i32, %c0_i32_0 : i32, i32, i32
  }
  func.func @transform_14(%arg0: i32) -> (i32, i32, i32) {
    %c0_i32 = arith.constant 0 : i32
    %c0_i32_0 = arith.constant 0 : i32
    %c0_i32_1 = arith.constant 0 : i32
    return %arg0, %c0_i32, %c0_i32_0 : i32, i32, i32
  }
  func.func @transform_15(%arg0: i32) -> (i32, i32, i32) {
    %c0_i32 = arith.constant 0 : i32
    %c0_i32_0 = arith.constant 0 : i32
    %c0_i32_1 = arith.constant 0 : i32
    return %arg0, %c0_i32, %c0_i32_0 : i32, i32, i32
  }
  func.func @transform_16(%arg0: i32) -> (i32, i32) {
    %c0_i32 = arith.constant 0 : i32
    %c0_i32_0 = arith.constant 0 : i32
    %c0_i32_1 = arith.constant 0 : i32
    return %c0_i32, %c0_i32_0 : i32, i32
  }
  func.func @transform_17(%arg0: i32) -> (i32, i32) {
    %c0_i32 = arith.constant 0 : i32
    %c0_i32_0 = arith.constant 0 : i32
    %c0_i32_1 = arith.constant 0 : i32
    return %c0_i32, %c0_i32_0 : i32, i32
  }
  func.func @transform_18(%arg0: i32) -> (i32, i32) {
    %c0_i32 = arith.constant 0 : i32
    %c0_i32_0 = arith.constant 0 : i32
    %c0_i32_1 = arith.constant 0 : i32
    return %c0_i32, %c0_i32_0 : i32, i32
  }
  func.func @transform_19(%arg0: i32) -> (i32, i32) {
    %c0_i32 = arith.constant 0 : i32
    %c0_i32_0 = arith.constant 0 : i32
    %c0_i32_1 = arith.constant 0 : i32
    return %c0_i32, %c0_i32_0 : i32, i32
  }
  func.func @transform_20(%arg0: i32) -> (i32, i32) {
    %c0_i32 = arith.constant 0 : i32
    %c0_i32_0 = arith.constant 0 : i32
    %c0_i32_1 = arith.constant 0 : i32
    return %c0_i32, %c0_i32_0 : i32, i32
  }
}

</mosaic_0001>

<llo_original>
// kernel: bert_regressor_forward.1
$region0: #{bert_regressor_forward.1}
  #allocation0 [shape = 'u32[]', space=smem, size = 0x4, offset = 0x4, fixed_abs, tag = 'smem constant byte address 0x4 - core index']
  #allocation1 [shape = 'u32[144,128]{1,0:T(1,128)}', space=vmem, size = 0x12000, scoped, tag = 'internal scratch']
  #allocation2 [shape = 'f32[16,32]{1,0:T(8,128)}', space=vmem, size = 0x2000, scoped, tag = 'scratch operand']
  #allocation3 [shape = 'f32[1,1]{1,0:T(1,128)S(1)}', space=vmem, size = 0x200, scoped, tag = 'scoped memory for bert_regressor_forward.1']
  %s0 = inlined_call_operand.vmem [shape: f32[16,32], index: 0, kind: input, shape index: {}]
  %s1 = inlined_call_operand.vmem [shape: f32[2,1,8], index: 1, kind: input, shape index: {}]
  %s2 = inlined_call_operand.vmem [shape: f32[1,32], index: 2, kind: input, shape index: {}]
  %s3 = inlined_call_operand.vmem [shape: f32[1,32], index: 3, kind: input, shape index: {}]
  %s4 = inlined_call_operand.vmem [shape: bf16[2,32,96], index: 4, kind: input, shape index: {}]
  %s5 = inlined_call_operand.vmem [shape: f32[2,1,96], index: 5, kind: input, shape index: {}]
  %s6 = inlined_call_operand.vmem [shape: bf16[2,32,32], index: 6, kind: input, shape index: {}]
  %s7 = inlined_call_operand.vmem [shape: f32[2,1,32], index: 7, kind: input, shape index: {}]
  %s8 = inlined_call_operand.vmem [shape: f32[2,1,32], index: 8, kind: input, shape index: {}]
  %s9 = inlined_call_operand.vmem [shape: f32[2,1,32], index: 9, kind: input, shape index: {}]
  %s10 = inlined_call_operand.vmem [shape: bf16[2,32,64], index: 10, kind: input, shape index: {}]
  %s11 = inlined_call_operand.vmem [shape: f32[2,1,64], index: 11, kind: input, shape index: {}]
  %s12 = inlined_call_operand.vmem [shape: bf16[2,64,32], index: 12, kind: input, shape index: {}]
  %s13 = inlined_call_operand.vmem [shape: f32[2,1,32], index: 13, kind: input, shape index: {}]
  %s14 = inlined_call_operand.vmem [shape: f32[2,1,32], index: 14, kind: input, shape index: {}]
  %s15 = inlined_call_operand.vmem [shape: f32[2,1,32], index: 15, kind: input, shape index: {}]
  %s16 = inlined_call_operand.vmem [shape: bf16[32,32], index: 16, kind: input, shape index: {}]
  %s17 = inlined_call_operand.vmem [shape: f32[1,32], index: 17, kind: input, shape index: {}]
  %s18 = inlined_call_operand.vmem [shape: f32[1,32], index: 18, kind: input, shape index: {}]
  %s19 = inlined_call_operand.<no memory space> [shape: f32[1,1], index: 19, kind: input, shape index: {}]
  %s20 = inlined_call_operand.vmem [shape: f32[2,1], index: 20, kind: output, shape index: {}]
  %s21 = sld [smem:[#allocation0]]
  $region121: #{bert_regressor_forward.1} parent=0
    _
  %s23 = ssub.s32 1, %s21
  %s24 = scalar_select 0, %s23, %s21
  %v25 = vstv %s19
  %26 = vst [vmem:[#allocation3] sm:$0x1] %v25
  loop: start=0, step=1, limit=4
  $region2: #{bert_regressor_forward.1} parent=0 // loop_pre_header
    _
  $region3: #{bert_regressor_forward.1} parent=0 // loop_header
    %s28 = sphi 0, %s32
    %p29 = scmp.ge.s32.totalorder %s28, 4
    %s36 = sphi 0, %s36
    %s38 = sphi 0, %s36
    %s39 = sphi 0, %s38
    %s53 = sphi 0, %s39
    %s57 = sphi 0, %s57
    %s59 = sphi 0, %s57
    %s60 = sphi 0, %s59
    %s74 = sphi 0, %s60
    %s78 = sphi 0, %s78
    %s80 = sphi 0, %s78
    %s81 = sphi 0, %s80
    %s95 = sphi 0, %s81
    %s99 = sphi 0, %s99
    %s101 = sphi 0, %s99
    %s102 = sphi 0, %s101
    %s116 = sphi 0, %s102
    %s122 = sphi 0, %s124
    %s125 = sphi 0, %s122
    %s126 = sphi 0, %s125
    %s142 = sphi 0, %s126
    %s148 = sphi 0, %s150
    %s151 = sphi 0, %s148
    %s152 = sphi 0, %s151
    %s168 = sphi 0, %s152
    %s174 = sphi 0, %s176
    %s177 = sphi 0, %s174
    %s178 = sphi 0, %s177
    %s194 = sphi 0, %s178
    %s200 = sphi 0, %s202
    %s203 = sphi 0, %s200
    %s204 = sphi 0, %s203
    %s220 = sphi 0, %s204
    %s226 = sphi 0, %s228
    %s229 = sphi 0, %s226
    %s230 = sphi 0, %s229
    %s246 = sphi 0, %s230
    %s252 = sphi 0, %s254
    %s255 = sphi 0, %s252
    %s256 = sphi 0, %s255
    %s272 = sphi 0, %s256
    %s278 = sphi 0, %s280
    %s281 = sphi 0, %s278
    %s282 = sphi 0, %s281
    %s298 = sphi 0, %s282
    %s304 = sphi 0, %s306
    %s307 = sphi 0, %s304
    %s308 = sphi 0, %s307
    %s324 = sphi 0, %s308
    %s330 = sphi 0, %s332
    %s333 = sphi 0, %s330
    %s334 = sphi 0, %s333
    %s350 = sphi 0, %s334
    %s356 = sphi 0, %s358
    %s359 = sphi 0, %s356
    %s360 = sphi 0, %s359
    %s376 = sphi 0, %s360
    %s382 = sphi 0, %s384
    %s385 = sphi 0, %s382
    %s386 = sphi 0, %s385
    %s402 = sphi 0, %s386
    %s408 = sphi 0, %s410
    %s411 = sphi 0, %s408
    %s412 = sphi 0, %s411
    %s428 = sphi 0, %s412
    %s432 = sphi 0, %s432
    %s434 = sphi 0, %s432
    %s435 = sphi 0, %s434
    %s449 = sphi 0, %s435
    %s453 = sphi 0, %s453
    %s455 = sphi 0, %s453
    %s456 = sphi 0, %s455
    %s470 = sphi 0, %s456
    %s474 = sphi 0, %s474
    %s476 = sphi 0, %s474
    %s477 = sphi 0, %s476
    %s491 = sphi 0, %s477
    %s495 = sphi 0, %s495
    %s497 = sphi 0, %s495
    %s498 = sphi 0, %s497
    %s512 = sphi 0, %s498
    %s516 = sphi 0, %s516
    %s518 = sphi 0, %s516
    %s519 = sphi 0, %s518
    %s533 = sphi 0, %s519
  $region4: #{bert_regressor_forward.1} parent=0 // loop_header_branch
    %31 = sbr.rel (%p29) target = $region8
  $region5: #{bert_regressor_forward.1} parent=0 // loop_body
    %s33 = ssub.s32 %s28, 1
    %s34 = ssub.s32 %s28, 2
    %s35 = sadd.s32 %s28, 1
    %s37 = sadd.s32 %s36, 1
    %p40 = scmp.eq.s32.totalorder %s28, 1
    %p41 = scmp.ne.s32.totalorder %s36, %s38
    %p42 = scmp.eq.s32.totalorder %s28, 0
    %p43 = por %p41, %p42
    %p44 = scmp.ne.s32.totalorder %s36, %s38
    %p45 = scmp.eq.s32.totalorder %s33, 1
    %p46 = por %p44, %p45
    %p47 = scmp.ne.s32.totalorder %s38, %s39
    %p48 = scmp.eq.s32.totalorder %s33, 0
    %p49 = por %p47, %p48
    %p50 = scmp.ne.s32.totalorder %s38, %s39
    %p51 = scmp.eq.s32.totalorder %s34, 1
    %p52 = por %p50, %p51
    %p54 = scmp.ne.s32.totalorder %s39, %s53
    %p55 = scmp.eq.s32.totalorder %s34, 0
    %p56 = por %p54, %p55
    %s58 = sadd.s32 %s57, 1
    %p61 = scmp.eq.s32.totalorder %s28, 1
    %p62 = scmp.ne.s32.totalorder %s57, %s59
    %p63 = scmp.eq.s32.totalorder %s28, 0
    %p64 = por %p62, %p63
    %p65 = scmp.ne.s32.totalorder %s57, %s59
    %p66 = scmp.eq.s32.totalorder %s33, 1
    %p67 = por %p65, %p66
    %p68 = scmp.ne.s32.totalorder %s59, %s60
    %p69 = scmp.eq.s32.totalorder %s33, 0
    %p70 = por %p68, %p69
    %p71 = scmp.ne.s32.totalorder %s59, %s60
    %p72 = scmp.eq.s32.totalorder %s34, 1
    %p73 = por %p71, %p72
    %p75 = scmp.ne.s32.totalorder %s60, %s74
    %p76 = scmp.eq.s32.totalorder %s34, 0
    %p77 = por %p75, %p76
    %s79 = sadd.s32 %s78, 1
    %p82 = scmp.eq.s32.totalorder %s28, 1
    %p83 = scmp.ne.s32.totalorder %s78, %s80
    %p84 = scmp.eq.s32.totalorder %s28, 0
    %p85 = por %p83, %p84
    %p86 = scmp.ne.s32.totalorder %s78, %s80
    %p87 = scmp.eq.s32.totalorder %s33, 1
    %p88 = por %p86, %p87
    %p89 = scmp.ne.s32.totalorder %s80, %s81
    %p90 = scmp.eq.s32.totalorder %s33, 0
    %p91 = por %p89, %p90
    %p92 = scmp.ne.s32.totalorder %s80, %s81
    %p93 = scmp.eq.s32.totalorder %s34, 1
    %p94 = por %p92, %p93
    %p96 = scmp.ne.s32.totalorder %s81, %s95
    %p97 = scmp.eq.s32.totalorder %s34, 0
    %p98 = por %p96, %p97
    %s100 = sadd.s32 %s99, 1
    %p103 = scmp.eq.s32.totalorder %s28, 1
    %p104 = scmp.ne.s32.totalorder %s99, %s101
    %p105 = scmp.eq.s32.totalorder %s28, 0
    %p106 = por %p104, %p105
    %p107 = scmp.ne.s32.totalorder %s99, %s101
    %p108 = scmp.eq.s32.totalorder %s33, 1
    %p109 = por %p107, %p108
    %p110 = scmp.ne.s32.totalorder %s101, %s102
    %p111 = scmp.eq.s32.totalorder %s33, 0
    %p112 = por %p110, %p111
    %p113 = scmp.ne.s32.totalorder %s101, %s102
    %p114 = scmp.eq.s32.totalorder %s34, 1
    %p115 = por %p113, %p114
    %p117 = scmp.ne.s32.totalorder %s102, %s116
    %p118 = scmp.eq.s32.totalorder %s34, 0
    %p119 = por %p117, %p118
    %s120 = ssub.s32 %s28, %s35
    %p121 = scmp.eq.s32.totalorder %s120, 0
    %s123 = sadd.s32 %s122, 1
    %s124 = scalar_select %p121, %s122, %s123
    %p127 = pneg %p121
    %p128 = scmp.eq.s32.totalorder %s28, 1
    %p129 = por %p127, %p128
    %p130 = scmp.ne.s32.totalorder %s122, %s125
    %p131 = scmp.eq.s32.totalorder %s28, 0
    %p132 = por %p130, %p131
    %p133 = scmp.ne.s32.totalorder %s122, %s125
    %p134 = scmp.eq.s32.totalorder %s33, 1
    %p135 = por %p133, %p134
    %p136 = scmp.ne.s32.totalorder %s125, %s126
    %p137 = scmp.eq.s32.totalorder %s33, 0
    %p138 = por %p136, %p137
    %p139 = scmp.ne.s32.totalorder %s125, %s126
    %p140 = scmp.eq.s32.totalorder %s34, 1
    %p141 = por %p139, %p140
    %p143 = scmp.ne.s32.totalorder %s126, %s142
    %p144 = scmp.eq.s32.totalorder %s34, 0
    %p145 = por %p143, %p144
    %s146 = ssub.s32 %s28, %s35
    %p147 = scmp.eq.s32.totalorder %s146, 0
    %s149 = sadd.s32 %s148, 1
    %s150 = scalar_select %p147, %s148, %s149
    %p153 = pneg %p147
    %p154 = scmp.eq.s32.totalorder %s28, 1
    %p155 = por %p153, %p154
    %p156 = scmp.ne.s32.totalorder %s148, %s151
    %p157 = scmp.eq.s32.totalorder %s28, 0
    %p158 = por %p156, %p157
    %p159 = scmp.ne.s32.totalorder %s148, %s151
    %p160 = scmp.eq.s32.totalorder %s33, 1
    %p161 = por %p159, %p160
    %p162 = scmp.ne.s32.totalorder %s151, %s152
    %p163 = scmp.eq.s32.totalorder %s33, 0
    %p164 = por %p162, %p163
    %p165 = scmp.ne.s32.totalorder %s151, %s152
    %p166 = scmp.eq.s32.totalorder %s34, 1
    %p167 = por %p165, %p166
    %p169 = scmp.ne.s32.totalorder %s152, %s168
    %p170 = scmp.eq.s32.totalorder %s34, 0
    %p171 = por %p169, %p170
    %s172 = ssub.s32 %s28, %s35
    %p173 = scmp.eq.s32.totalorder %s172, 0
    %s175 = sadd.s32 %s174, 1
    %s176 = scalar_select %p173, %s174, %s175
    %p179 = pneg %p173
    %p180 = scmp.eq.s32.totalorder %s28, 1
    %p181 = por %p179, %p180
    %p182 = scmp.ne.s32.totalorder %s174, %s177
    %p183 = scmp.eq.s32.totalorder %s28, 0
    %p184 = por %p182, %p183
    %p185 = scmp.ne.s32.totalorder %s174, %s177
    %p186 = scmp.eq.s32.totalorder %s33, 1
    %p187 = por %p185, %p186
    %p188 = scmp.ne.s32.totalorder %s177, %s178
    %p189 = scmp.eq.s32.totalorder %s33, 0
    %p190 = por %p188, %p189
    %p191 = scmp.ne.s32.totalorder %s177, %s178
    %p192 = scmp.eq.s32.totalorder %s34, 1
    %p193 = por %p191, %p192
    %p195 = scmp.ne.s32.totalorder %s178, %s194
    %p196 = scmp.eq.s32.totalorder %s34, 0
    %p197 = por %p195, %p196
    %s198 = ssub.s32 %s28, %s35
    %p199 = scmp.eq.s32.totalorder %s198, 0
    %s201 = sadd.s32 %s200, 1
    %s202 = scalar_select %p199, %s200, %s201
    %p205 = pneg %p199
    %p206 = scmp.eq.s32.totalorder %s28, 1
    %p207 = por %p205, %p206
    %p208 = scmp.ne.s32.totalorder %s200, %s203
    %p209 = scmp.eq.s32.totalorder %s28, 0
    %p210 = por %p208, %p209
    %p211 = scmp.ne.s32.totalorder %s200, %s203
    %p212 = scmp.eq.s32.totalorder %s33, 1
    %p213 = por %p211, %p212
    %p214 = scmp.ne.s32.totalorder %s203, %s204
    %p215 = scmp.eq.s32.totalorder %s33, 0
    %p216 = por %p214, %p215
    %p217 = scmp.ne.s32.totalorder %s203, %s204
    %p218 = scmp.eq.s32.totalorder %s34, 1
    %p219 = por %p217, %p218
    %p221 = scmp.ne.s32.totalorder %s204, %s220
    %p222 = scmp.eq.s32.totalorder %s34, 0
    %p223 = por %p221, %p222
    %s224 = ssub.s32 %s28, %s35
    %p225 = scmp.eq.s32.totalorder %s224, 0
    %s227 = sadd.s32 %s226, 1
    %s228 = scalar_select %p225, %s226, %s227
    %p231 = pneg %p225
    %p232 = scmp.eq.s32.totalorder %s28, 1
    %p233 = por %p231, %p232
    %p234 = scmp.ne.s32.totalorder %s226, %s229
    %p235 = scmp.eq.s32.totalorder %s28, 0
    %p236 = por %p234, %p235
    %p237 = scmp.ne.s32.totalorder %s226, %s229
    %p238 = scmp.eq.s32.totalorder %s33, 1
    %p239 = por %p237, %p238
    %p240 = scmp.ne.s32.totalorder %s229, %s230
    %p241 = scmp.eq.s32.totalorder %s33, 0
    %p242 = por %p240, %p241
    %p243 = scmp.ne.s32.totalorder %s229, %s230
    %p244 = scmp.eq.s32.totalorder %s34, 1
    %p245 = por %p243, %p244
    %p247 = scmp.ne.s32.totalorder %s230, %s246
    %p248 = scmp.eq.s32.totalorder %s34, 0
    %p249 = por %p247, %p248
    %s250 = ssub.s32 %s28, %s35
    %p251 = scmp.eq.s32.totalorder %s250, 0
    %s253 = sadd.s32 %s252, 1
    %s254 = scalar_select %p251, %s252, %s253
    %p257 = pneg %p251
    %p258 = scmp.eq.s32.totalorder %s28, 1
    %p259 = por %p257, %p258
    %p260 = scmp.ne.s32.totalorder %s252, %s255
    %p261 = scmp.eq.s32.totalorder %s28, 0
    %p262 = por %p260, %p261
    %p263 = scmp.ne.s32.totalorder %s252, %s255
    %p264 = scmp.eq.s32.totalorder %s33, 1
    %p265 = por %p263, %p264
    %p266 = scmp.ne.s32.totalorder %s255, %s256
    %p267 = scmp.eq.s32.totalorder %s33, 0
    %p268 = por %p266, %p267
    %p269 = scmp.ne.s32.totalorder %s255, %s256
    %p270 = scmp.eq.s32.totalorder %s34, 1
    %p271 = por %p269, %p270
    %p273 = scmp.ne.s32.totalorder %s256, %s272
    %p274 = scmp.eq.s32.totalorder %s34, 0
    %p275 = por %p273, %p274
    %s276 = ssub.s32 %s28, %s35
    %p277 = scmp.eq.s32.totalorder %s276, 0
    %s279 = sadd.s32 %s278, 1
    %s280 = scalar_select %p277, %s278, %s279
    %p283 = pneg %p277
    %p284 = scmp.eq.s32.totalorder %s28, 1
    %p285 = por %p283, %p284
    %p286 = scmp.ne.s32.totalorder %s278, %s281
    %p287 = scmp.eq.s32.totalorder %s28, 0
    %p288 = por %p286, %p287
    %p289 = scmp.ne.s32.totalorder %s278, %s281
    %p290 = scmp.eq.s32.totalorder %s33, 1
    %p291 = por %p289, %p290
    %p292 = scmp.ne.s32.totalorder %s281, %s282
    %p293 = scmp.eq.s32.totalorder %s33, 0
    %p294 = por %p292, %p293
    %p295 = scmp.ne.s32.totalorder %s281, %s282
    %p296 = scmp.eq.s32.totalorder %s34, 1
    %p297 = por %p295, %p296
    %p299 = scmp.ne.s32.totalorder %s282, %s298
    %p300 = scmp.eq.s32.totalorder %s34, 0
    %p301 = por %p299, %p300
    %s302 = ssub.s32 %s28, %s35
    %p303 = scmp.eq.s32.totalorder %s302, 0
    %s305 = sadd.s32 %s304, 1
    %s306 = scalar_select %p303, %s304, %s305
    %p309 = pneg %p303
    %p310 = scmp.eq.s32.totalorder %s28, 1
    %p311 = por %p309, %p310
    %p312 = scmp.ne.s32.totalorder %s304, %s307
    %p313 = scmp.eq.s32.totalorder %s28, 0
    %p314 = por %p312, %p313
    %p315 = scmp.ne.s32.totalorder %s304, %s307
    %p316 = scmp.eq.s32.totalorder %s33, 1
    %p317 = por %p315, %p316
    %p318 = scmp.ne.s32.totalorder %s307, %s308
    %p319 = scmp.eq.s32.totalorder %s33, 0
    %p320 = por %p318, %p319
    %p321 = scmp.ne.s32.totalorder %s307, %s308
    %p322 = scmp.eq.s32.totalorder %s34, 1
    %p323 = por %p321, %p322
    %p325 = scmp.ne.s32.totalorder %s308, %s324
    %p326 = scmp.eq.s32.totalorder %s34, 0
    %p327 = por %p325, %p326
    %s328 = ssub.s32 %s28, %s35
    %p329 = scmp.eq.s32.totalorder %s328, 0
    %s331 = sadd.s32 %s330, 1
    %s332 = scalar_select %p329, %s330, %s331
    %p335 = pneg %p329
    %p336 = scmp.eq.s32.totalorder %s28, 1
    %p337 = por %p335, %p336
    %p338 = scmp.ne.s32.totalorder %s330, %s333
    %p339 = scmp.eq.s32.totalorder %s28, 0
    %p340 = por %p338, %p339
    %p341 = scmp.ne.s32.totalorder %s330, %s333
    %p342 = scmp.eq.s32.totalorder %s33, 1
    %p343 = por %p341, %p342
    %p344 = scmp.ne.s32.totalorder %s333, %s334
    %p345 = scmp.eq.s32.totalorder %s33, 0
    %p346 = por %p344, %p345
    %p347 = scmp.ne.s32.totalorder %s333, %s334
    %p348 = scmp.eq.s32.totalorder %s34, 1
    %p349 = por %p347, %p348
    %p351 = scmp.ne.s32.totalorder %s334, %s350
    %p352 = scmp.eq.s32.totalorder %s34, 0
    %p353 = por %p351, %p352
    %s354 = ssub.s32 %s28, %s35
    %p355 = scmp.eq.s32.totalorder %s354, 0
    %s357 = sadd.s32 %s356, 1
    %s358 = scalar_select %p355, %s356, %s357
    %p361 = pneg %p355
    %p362 = scmp.eq.s32.totalorder %s28, 1
    %p363 = por %p361, %p362
    %p364 = scmp.ne.s32.totalorder %s356, %s359
    %p365 = scmp.eq.s32.totalorder %s28, 0
    %p366 = por %p364, %p365
    %p367 = scmp.ne.s32.totalorder %s356, %s359
    %p368 = scmp.eq.s32.totalorder %s33, 1
    %p369 = por %p367, %p368
    %p370 = scmp.ne.s32.totalorder %s359, %s360
    %p371 = scmp.eq.s32.totalorder %s33, 0
    %p372 = por %p370, %p371
    %p373 = scmp.ne.s32.totalorder %s359, %s360
    %p374 = scmp.eq.s32.totalorder %s34, 1
    %p375 = por %p373, %p374
    %p377 = scmp.ne.s32.totalorder %s360, %s376
    %p378 = scmp.eq.s32.totalorder %s34, 0
    %p379 = por %p377, %p378
    %s380 = ssub.s32 %s28, %s35
    %p381 = scmp.eq.s32.totalorder %s380, 0
    %s383 = sadd.s32 %s382, 1
    %s384 = scalar_select %p381, %s382, %s383
    %p387 = pneg %p381
    %p388 = scmp.eq.s32.totalorder %s28, 1
    %p389 = por %p387, %p388
    %p390 = scmp.ne.s32.totalorder %s382, %s385
    %p391 = scmp.eq.s32.totalorder %s28, 0
    %p392 = por %p390, %p391
    %p393 = scmp.ne.s32.totalorder %s382, %s385
    %p394 = scmp.eq.s32.totalorder %s33, 1
    %p395 = por %p393, %p394
    %p396 = scmp.ne.s32.totalorder %s385, %s386
    %p397 = scmp.eq.s32.totalorder %s33, 0
    %p398 = por %p396, %p397
    %p399 = scmp.ne.s32.totalorder %s385, %s386
    %p400 = scmp.eq.s32.totalorder %s34, 1
    %p401 = por %p399, %p400
    %p403 = scmp.ne.s32.totalorder %s386, %s402
    %p404 = scmp.eq.s32.totalorder %s34, 0
    %p405 = por %p403, %p404
    %s406 = ssub.s32 %s28, %s35
    %p407 = scmp.eq.s32.totalorder %s406, 0
    %s409 = sadd.s32 %s408, 1
    %s410 = scalar_select %p407, %s408, %s409
    %p413 = pneg %p407
    %p414 = scmp.eq.s32.totalorder %s28, 1
    %p415 = por %p413, %p414
    %p416 = scmp.ne.s32.totalorder %s408, %s411
    %p417 = scmp.eq.s32.totalorder %s28, 0
    %p418 = por %p416, %p417
    %p419 = scmp.ne.s32.totalorder %s408, %s411
    %p420 = scmp.eq.s32.totalorder %s33, 1
    %p421 = por %p419, %p420
    %p422 = scmp.ne.s32.totalorder %s411, %s412
    %p423 = scmp.eq.s32.totalorder %s33, 0
    %p424 = por %p422, %p423
    %p425 = scmp.ne.s32.totalorder %s411, %s412
    %p426 = scmp.eq.s32.totalorder %s34, 1
    %p427 = por %p425, %p426
    %p429 = scmp.ne.s32.totalorder %s412, %s428
    %p430 = scmp.eq.s32.totalorder %s34, 0
    %p431 = por %p429, %p430
    %s433 = sadd.s32 %s432, 1
    %p436 = scmp.eq.s32.totalorder %s28, 1
    %p437 = scmp.ne.s32.totalorder %s432, %s434
    %p438 = scmp.eq.s32.totalorder %s28, 0
    %p439 = por %p437, %p438
    %p440 = scmp.ne.s32.totalorder %s432, %s434
    %p441 = scmp.eq.s32.totalorder %s33, 1
    %p442 = por %p440, %p441
    %p443 = scmp.ne.s32.totalorder %s434, %s435
    %p444 = scmp.eq.s32.totalorder %s33, 0
    %p445 = por %p443, %p444
    %p446 = scmp.ne.s32.totalorder %s434, %s435
    %p447 = scmp.eq.s32.totalorder %s34, 1
    %p448 = por %p446, %p447
    %p450 = scmp.ne.s32.totalorder %s435, %s449
    %p451 = scmp.eq.s32.totalorder %s34, 0
    %p452 = por %p450, %p451
    %s454 = sadd.s32 %s453, 1
    %p457 = scmp.eq.s32.totalorder %s28, 1
    %p458 = scmp.ne.s32.totalorder %s453, %s455
    %p459 = scmp.eq.s32.totalorder %s28, 0
    %p460 = por %p458, %p459
    %p461 = scmp.ne.s32.totalorder %s453, %s455
    %p462 = scmp.eq.s32.totalorder %s33, 1
    %p463 = por %p461, %p462
    %p464 = scmp.ne.s32.totalorder %s455, %s456
    %p465 = scmp.eq.s32.totalorder %s33, 0
    %p466 = por %p464, %p465
    %p467 = scmp.ne.s32.totalorder %s455, %s456
    %p468 = scmp.eq.s32.totalorder %s34, 1
    %p469 = por %p467, %p468
    %p471 = scmp.ne.s32.totalorder %s456, %s470
    %p472 = scmp.eq.s32.totalorder %s34, 0
    %p473 = por %p471, %p472
    %s475 = sadd.s32 %s474, 1
    %p478 = scmp.eq.s32.totalorder %s28, 1
    %p479 = scmp.ne.s32.totalorder %s474, %s476
    %p480 = scmp.eq.s32.totalorder %s28, 0
    %p481 = por %p479, %p480
    %p482 = scmp.ne.s32.totalorder %s474, %s476
    %p483 = scmp.eq.s32.totalorder %s33, 1
    %p484 = por %p482, %p483
    %p485 = scmp.ne.s32.totalorder %s476, %s477
    %p486 = scmp.eq.s32.totalorder %s33, 0
    %p487 = por %p485, %p486
    %p488 = scmp.ne.s32.totalorder %s476, %s477
    %p489 = scmp.eq.s32.totalorder %s34, 1
    %p490 = por %p488, %p489
    %p492 = scmp.ne.s32.totalorder %s477, %s491
    %p493 = scmp.eq.s32.totalorder %s34, 0
    %p494 = por %p492, %p493
    %s496 = sadd.s32 %s495, 1
    %p499 = scmp.eq.s32.totalorder %s28, 1
    %p500 = scmp.ne.s32.totalorder %s495, %s497
    %p501 = scmp.eq.s32.totalorder %s28, 0
    %p502 = por %p500, %p501
    %p503 = scmp.ne.s32.totalorder %s495, %s497
    %p504 = scmp.eq.s32.totalorder %s33, 1
    %p505 = por %p503, %p504
    %p506 = scmp.ne.s32.totalorder %s497, %s498
    %p507 = scmp.eq.s32.totalorder %s33, 0
    %p508 = por %p506, %p507
    %p509 = scmp.ne.s32.totalorder %s497, %s498
    %p510 = scmp.eq.s32.totalorder %s34, 1
    %p511 = por %p509, %p510
    %p513 = scmp.ne.s32.totalorder %s498, %s512
    %p514 = scmp.eq.s32.totalorder %s34, 0
    %p515 = por %p513, %p514
    %s517 = sadd.s32 %s516, 1
    %p520 = scmp.eq.s32.totalorder %s28, 1
    %p521 = scmp.ne.s32.totalorder %s516, %s518
    %p522 = scmp.eq.s32.totalorder %s28, 0
    %p523 = por %p521, %p522
    %p524 = scmp.ne.s32.totalorder %s516, %s518
    %p525 = scmp.eq.s32.totalorder %s33, 1
    %p526 = por %p524, %p525
    %p527 = scmp.ne.s32.totalorder %s518, %s519
    %p528 = scmp.eq.s32.totalorder %s33, 0
    %p529 = por %p527, %p528
    %p530 = scmp.ne.s32.totalorder %s518, %s519
    %p531 = scmp.eq.s32.totalorder %s34, 1
    %p532 = por %p530, %p531
    %p534 = scmp.ne.s32.totalorder %s519, %s533
    %p535 = scmp.eq.s32.totalorder %s34, 0
    %p536 = por %p534, %p535
    %p537 = scmp.le.s32.totalorder 1, %s28
    %p538 = scmp.lt.s32.totalorder %s28, 3
    %p539 = pnand %p537, %p538
    %p540 = pneg %p539
    // Predicated region
    $region9: #{bert_regressor_forward.1} parent=5 // pred_check
      _
    $region10: #{bert_regressor_forward.1} parent=5 // pred_check_branch
      %542 = sbr.rel (%p539) target = $region12
    $region11: #{bert_regressor_forward.1} parent=5 // pred_region
      %s543 = ssub.s32 %s28, 1
      // Predicated region
      $region13: #{bert_regressor_forward.1} parent=11 // pred_check
        %p544 = pneg %p49
      $region14: #{bert_regressor_forward.1} parent=11 // pred_check_branch
        %546 = sbr.rel (%p544) target = $region16
      $region15: #{bert_regressor_forward.1} parent=11 // pred_region
        _
      $region16: #{bert_regressor_forward.1} parent=11 // pred_fallthru
        _
      // Predicated region
      $region17: #{bert_regressor_forward.1} parent=11 // pred_check
        %p547 = pneg %p70
      $region18: #{bert_regressor_forward.1} parent=11 // pred_check_branch
        %549 = sbr.rel (%p547) target = $region20
      $region19: #{bert_regressor_forward.1} parent=11 // pred_region
        _
      $region20: #{bert_regressor_forward.1} parent=11 // pred_fallthru
        _
      // Predicated region
      $region21: #{bert_regressor_forward.1} parent=11 // pred_check
        %p550 = pneg %p91
      $region22: #{bert_regressor_forward.1} parent=11 // pred_check_branch
        %552 = sbr.rel (%p550) target = $region24
      $region23: #{bert_regressor_forward.1} parent=11 // pred_region
        _
      $region24: #{bert_regressor_forward.1} parent=11 // pred_fallthru
        _
      // Predicated region
      $region25: #{bert_regressor_forward.1} parent=11 // pred_check
        %p553 = pneg %p112
      $region26: #{bert_regressor_forward.1} parent=11 // pred_check_branch
        %555 = sbr.rel (%p553) target = $region28
      $region27: #{bert_regressor_forward.1} parent=11 // pred_region
        _
      $region28: #{bert_regressor_forward.1} parent=11 // pred_fallthru
        _
      // Predicated region
      $region29: #{bert_regressor_forward.1} parent=11 // pred_check
        %p556 = pneg %p445
      $region30: #{bert_regressor_forward.1} parent=11 // pred_check_branch
        %558 = sbr.rel (%p556) target = $region32
      $region31: #{bert_regressor_forward.1} parent=11 // pred_region
        _
      $region32: #{bert_regressor_forward.1} parent=11 // pred_fallthru
        _
      // Predicated region
      $region33: #{bert_regressor_forward.1} parent=11 // pred_check
        %p559 = pneg %p466
      $region34: #{bert_regressor_forward.1} parent=11 // pred_check_branch
        %561 = sbr.rel (%p559) target = $region36
      $region35: #{bert_regressor_forward.1} parent=11 // pred_region
        _
      $region36: #{bert_regressor_forward.1} parent=11 // pred_fallthru
        _
      // Predicated region
      $region37: #{bert_regressor_forward.1} parent=11 // pred_check
        %p562 = pneg %p487
      $region38: #{bert_regressor_forward.1} parent=11 // pred_check_branch
        %564 = sbr.rel (%p562) target = $region40
      $region39: #{bert_regressor_forward.1} parent=11 // pred_region
        _
      $region40: #{bert_regressor_forward.1} parent=11 // pred_fallthru
        _
      // Predicated region
      $region41: #{bert_regressor_forward.1} parent=11 // pred_check
        %p565 = pneg %p508
      $region42: #{bert_regressor_forward.1} parent=11 // pred_check_branch
        %567 = sbr.rel (%p565) target = $region44
      $region43: #{bert_regressor_forward.1} parent=11 // pred_region
        _
      $region44: #{bert_regressor_forward.1} parent=11 // pred_fallthru
        _
    $region12: #{bert_regressor_forward.1} parent=5 // pred_fallthru
      _
    %p568 = scmp.lt.s32.totalorder %s28, 2
    // Predicated region
    $region45: #{bert_regressor_forward.1} parent=5 // pred_check
      %p569 = pneg %p568
    $region46: #{bert_regressor_forward.1} parent=5 // pred_check_branch
      %571 = sbr.rel (%p569) target = $region48
    $region47: #{bert_regressor_forward.1} parent=5 // pred_region
      // Predicated region
      $region49: #{bert_regressor_forward.1} parent=47 // pred_check
        %p572 = pneg %p132
      $region50: #{bert_regressor_forward.1} parent=47 // pred_check_branch
        %574 = sbr.rel (%p572) target = $region52
      $region51: #{bert_regressor_forward.1} parent=47 // pred_region
        %p575 = scmp.lt.s32.totalorder %s28, 1
        %s576 = scalar_select %p575, %s28, 1
        %s577 = smul.addr %s576, 4
        %s578 = smul.addr %s577, 4
        %s579 = scalar_lea.vmem %s4, %s578
      $region52: #{bert_regressor_forward.1} parent=47 // pred_fallthru
        _
      // Predicated region
      $region53: #{bert_regressor_forward.1} parent=47 // pred_check
        %p580 = pneg %p158
      $region54: #{bert_regressor_forward.1} parent=47 // pred_check_branch
        %582 = sbr.rel (%p580) target = $region56
      $region55: #{bert_regressor_forward.1} parent=47 // pred_region
        %p583 = scmp.lt.s32.totalorder %s28, 1
        %s584 = scalar_select %p583, %s28, 1
        %s585 = scalar_lea.vmem %s5, %s584
      $region56: #{bert_regressor_forward.1} parent=47 // pred_fallthru
        _
      // Predicated region
      $region57: #{bert_regressor_forward.1} parent=47 // pred_check
        %p586 = pneg %p184
      $region58: #{bert_regressor_forward.1} parent=47 // pred_check_branch
        %588 = sbr.rel (%p586) target = $region60
      $region59: #{bert_regressor_forward.1} parent=47 // pred_region
        %p589 = scmp.lt.s32.totalorder %s28, 1
        %s590 = scalar_select %p589, %s28, 1
        %s591 = smul.addr %s590, 4
        %s592 = smul.addr %s591, 4
        %s593 = scalar_lea.vmem %s6, %s592
      $region60: #{bert_regressor_forward.1} parent=47 // pred_fallthru
        _
      // Predicated region
      $region61: #{bert_regressor_forward.1} parent=47 // pred_check
        %p594 = pneg %p210
      $region62: #{bert_regressor_forward.1} parent=47 // pred_check_branch
        %596 = sbr.rel (%p594) target = $region64
      $region63: #{bert_regressor_forward.1} parent=47 // pred_region
        %p597 = scmp.lt.s32.totalorder %s28, 1
        %s598 = scalar_select %p597, %s28, 1
        %s599 = scalar_lea.vmem %s7, %s598
      $region64: #{bert_regressor_forward.1} parent=47 // pred_fallthru
        _
      // Predicated region
      $region65: #{bert_regressor_forward.1} parent=47 // pred_check
        %p600 = pneg %p236
      $region66: #{bert_regressor_forward.1} parent=47 // pred_check_branch
        %602 = sbr.rel (%p600) target = $region68
      $region67: #{bert_regressor_forward.1} parent=47 // pred_region
        %p603 = scmp.lt.s32.totalorder %s28, 1
        %s604 = scalar_select %p603, %s28, 1
        %s605 = scalar_lea.vmem %s8, %s604
      $region68: #{bert_regressor_forward.1} parent=47 // pred_fallthru
        _
      // Predicated region
      $region69: #{bert_regressor_forward.1} parent=47 // pred_check
        %p606 = pneg %p262
      $region70: #{bert_regressor_forward.1} parent=47 // pred_check_branch
        %608 = sbr.rel (%p606) target = $region72
      $region71: #{bert_regressor_forward.1} parent=47 // pred_region
        %p609 = scmp.lt.s32.totalorder %s28, 1
        %s610 = scalar_select %p609, %s28, 1
        %s611 = scalar_lea.vmem %s9, %s610
      $region72: #{bert_regressor_forward.1} parent=47 // pred_fallthru
        _
      // Predicated region
      $region73: #{bert_regressor_forward.1} parent=47 // pred_check
        %p612 = pneg %p288
      $region74: #{bert_regressor_forward.1} parent=47 // pred_check_branch
        %614 = sbr.rel (%p612) target = $region76
      $region75: #{bert_regressor_forward.1} parent=47 // pred_region
        %p615 = scmp.lt.s32.totalorder %s28, 1
        %s616 = scalar_select %p615, %s28, 1
        %s617 = smul.addr %s616, 4
        %s618 = smul.addr %s617, 4
        %s619 = scalar_lea.vmem %s10, %s618
      $region76: #{bert_regressor_forward.1} parent=47 // pred_fallthru
        _
      // Predicated region
      $region77: #{bert_regressor_forward.1} parent=47 // pred_check
        %p620 = pneg %p314
      $region78: #{bert_regressor_forward.1} parent=47 // pred_check_branch
        %622 = sbr.rel (%p620) target = $region80
      $region79: #{bert_regressor_forward.1} parent=47 // pred_region
        %p623 = scmp.lt.s32.totalorder %s28, 1
        %s624 = scalar_select %p623, %s28, 1
        %s625 = scalar_lea.vmem %s11, %s624
      $region80: #{bert_regressor_forward.1} parent=47 // pred_fallthru
        _
      // Predicated region
      $region81: #{bert_regressor_forward.1} parent=47 // pred_check
        %p626 = pneg %p340
      $region82: #{bert_regressor_forward.1} parent=47 // pred_check_branch
        %628 = sbr.rel (%p626) target = $region84
      $region83: #{bert_regressor_forward.1} parent=47 // pred_region
        %p629 = scmp.lt.s32.totalorder %s28, 1
        %s630 = scalar_select %p629, %s28, 1
        %s631 = smul.addr %s630, 8
        %s632 = smul.addr %s631, 4
        %s633 = scalar_lea.vmem %s12, %s632
      $region84: #{bert_regressor_forward.1} parent=47 // pred_fallthru
        _
      // Predicated region
      $region85: #{bert_regressor_forward.1} parent=47 // pred_check
        %p634 = pneg %p366
      $region86: #{bert_regressor_forward.1} parent=47 // pred_check_branch
        %636 = sbr.rel (%p634) target = $region88
      $region87: #{bert_regressor_forward.1} parent=47 // pred_region
        %p637 = scmp.lt.s32.totalorder %s28, 1
        %s638 = scalar_select %p637, %s28, 1
        %s639 = scalar_lea.vmem %s13, %s638
      $region88: #{bert_regressor_forward.1} parent=47 // pred_fallthru
        _
      // Predicated region
      $region89: #{bert_regressor_forward.1} parent=47 // pred_check
        %p640 = pneg %p392
      $region90: #{bert_regressor_forward.1} parent=47 // pred_check_branch
        %642 = sbr.rel (%p640) target = $region92
      $region91: #{bert_regressor_forward.1} parent=47 // pred_region
        %p643 = scmp.lt.s32.totalorder %s28, 1
        %s644 = scalar_select %p643, %s28, 1
        %s645 = scalar_lea.vmem %s14, %s644
      $region92: #{bert_regressor_forward.1} parent=47 // pred_fallthru
        _
      // Predicated region
      $region93: #{bert_regressor_forward.1} parent=47 // pred_check
        %p646 = pneg %p418
      $region94: #{bert_regressor_forward.1} parent=47 // pred_check_branch
        %648 = sbr.rel (%p646) target = $region96
      $region95: #{bert_regressor_forward.1} parent=47 // pred_region
        %p649 = scmp.lt.s32.totalorder %s28, 1
        %s650 = scalar_select %p649, %s28, 1
        %s651 = scalar_lea.vmem %s15, %s650
      $region96: #{bert_regressor_forward.1} parent=47 // pred_fallthru
        _
    $region48: #{bert_regressor_forward.1} parent=5 // pred_fallthru
      _
    %p652 = scmp.le.s32.totalorder 1, %s28
    %p653 = scmp.lt.s32.totalorder %s28, 3
    %p654 = pnand %p652, %p653
    %p655 = pneg %p654
    // Predicated region
    $region97: #{bert_regressor_forward.1} parent=5 // pred_check
      _
    $region98: #{bert_regressor_forward.1} parent=5 // pred_check_branch
      %657 = sbr.rel (%p654) target = $region100
    $region99: #{bert_regressor_forward.1} parent=5 // pred_region
      %s658 = ssub.s32 %s28, 1
      %p659 = pneg %p49
      %p660 = pneg %p46
      %p661 = pneg %p70
      %p662 = pneg %p67
      %p663 = pneg %p91
      %p664 = pneg %p88
      %p665 = pneg %p112
      %p666 = pneg %p109
      %p667 = scmp.lt.s32.totalorder %s33, 1
      %s668 = scalar_select %p667, %s33, 1
      %s669 = smul.addr %s668, 4
      %s670 = smul.addr %s669, 4
      %s671 = scalar_lea.vmem %s4, %s670
      %p672 = pneg %p138
      %p673 = pneg %p135
      %p674 = scmp.lt.s32.totalorder %s33, 1
      %s675 = scalar_select %p674, %s33, 1
      %s676 = scalar_lea.vmem %s5, %s675
      %p677 = pneg %p164
      %p678 = pneg %p161
      %p679 = scmp.lt.s32.totalorder %s33, 1
      %s680 = scalar_select %p679, %s33, 1
      %s681 = smul.addr %s680, 4
      %s682 = smul.addr %s681, 4
      %s683 = scalar_lea.vmem %s6, %s682
      %p684 = pneg %p190
      %p685 = pneg %p187
      %p686 = scmp.lt.s32.totalorder %s33, 1
      %s687 = scalar_select %p686, %s33, 1
      %s688 = scalar_lea.vmem %s7, %s687
      %p689 = pneg %p216
      %p690 = pneg %p213
      %p691 = scmp.lt.s32.totalorder %s33, 1
      %s692 = scalar_select %p691, %s33, 1
      %s693 = scalar_lea.vmem %s8, %s692
      %p694 = pneg %p242
      %p695 = pneg %p239
      %p696 = scmp.lt.s32.totalorder %s33, 1
      %s697 = scalar_select %p696, %s33, 1
      %s698 = scalar_lea.vmem %s9, %s697
      %p699 = pneg %p268
      %p700 = pneg %p265
      %p701 = scmp.lt.s32.totalorder %s33, 1
      %s702 = scalar_select %p701, %s33, 1
      %s703 = smul.addr %s702, 4
      %s704 = smul.addr %s703, 4
      %s705 = scalar_lea.vmem %s10, %s704
      %p706 = pneg %p294
      %p707 = pneg %p291
      %p708 = scmp.lt.s32.totalorder %s33, 1
      %s709 = scalar_select %p708, %s33, 1
      %s710 = scalar_lea.vmem %s11, %s709
      %p711 = pneg %p320
      %p712 = pneg %p317
      %p713 = scmp.lt.s32.totalorder %s33, 1
      %s714 = scalar_select %p713, %s33, 1
      %s715 = smul.addr %s714, 8
      %s716 = smul.addr %s715, 4
      %s717 = scalar_lea.vmem %s12, %s716
      %p718 = pneg %p346
      %p719 = pneg %p343
      %p720 = scmp.lt.s32.totalorder %s33, 1
      %s721 = scalar_select %p720, %s33, 1
      %s722 = scalar_lea.vmem %s13, %s721
      %p723 = pneg %p372
      %p724 = pneg %p369
      %p725 = scmp.lt.s32.totalorder %s33, 1
      %s726 = scalar_select %p725, %s33, 1
      %s727 = scalar_lea.vmem %s14, %s726
      %p728 = pneg %p398
      %p729 = pneg %p395
      %p730 = scmp.lt.s32.totalorder %s33, 1
      %s731 = scalar_select %p730, %s33, 1
      %s732 = scalar_lea.vmem %s15, %s731
      %p733 = pneg %p424
      %p734 = pneg %p421
      %p735 = pneg %p445
      %p736 = pneg %p442
      %p737 = pneg %p466
      %p738 = pneg %p463
      %p739 = pneg %p487
      %p740 = pneg %p484
      %p741 = pneg %p508
      %p742 = pneg %p505
      %p743 = pneg %p529
      %p744 = pneg %p526
      %p745 = scmp.lt.s32.totalorder %s33, 1
      %s746 = scalar_select %p745, %s33, 1
      %s747 = smul.addr %s746, 4
      %s748 = smul.addr %s747, 4
      %s749 = scalar_lea.vmem %s4, %s748
      %p750 = scmp.lt.s32.totalorder %s33, 1
      %s751 = scalar_select %p750, %s33, 1
      %s752 = scalar_lea.vmem %s5, %s751
      %p753 = scmp.lt.s32.totalorder %s33, 1
      %s754 = scalar_select %p753, %s33, 1
      %s755 = smul.addr %s754, 4
      %s756 = smul.addr %s755, 4
      %s757 = scalar_lea.vmem %s6, %s756
      %p758 = scmp.lt.s32.totalorder %s33, 1
      %s759 = scalar_select %p758, %s33, 1
      %s760 = scalar_lea.vmem %s7, %s759
      %p761 = scmp.lt.s32.totalorder %s33, 1
      %s762 = scalar_select %p761, %s33, 1
      %s763 = scalar_lea.vmem %s8, %s762
      %p764 = scmp.lt.s32.totalorder %s33, 1
      %s765 = scalar_select %p764, %s33, 1
      %s766 = scalar_lea.vmem %s9, %s765
      %p767 = scmp.lt.s32.totalorder %s33, 1
      %s768 = scalar_select %p767, %s33, 1
      %s769 = smul.addr %s768, 4
      %s770 = smul.addr %s769, 4
      %s771 = scalar_lea.vmem %s10, %s770
      %p772 = scmp.lt.s32.totalorder %s33, 1
      %s773 = scalar_select %p772, %s33, 1
      %s774 = scalar_lea.vmem %s11, %s773
      %p775 = scmp.lt.s32.totalorder %s33, 1
      %s776 = scalar_select %p775, %s33, 1
      %s777 = smul.addr %s776, 8
      %s778 = smul.addr %s777, 4
      %s779 = scalar_lea.vmem %s12, %s778
      %p780 = scmp.lt.s32.totalorder %s33, 1
      %s781 = scalar_select %p780, %s33, 1
      %s782 = scalar_lea.vmem %s13, %s781
      %p783 = scmp.lt.s32.totalorder %s33, 1
      %s784 = scalar_select %p783, %s33, 1
      %s785 = scalar_lea.vmem %s14, %s784
      %p786 = scmp.lt.s32.totalorder %s33, 1
      %s787 = scalar_select %p786, %s33, 1
      %s788 = scalar_lea.vmem %s15, %s787
      %p790 = scmp.eq.s32.totalorder %s33, 0
      // Predicated region
      $region101: #{bert_regressor_forward.1} parent=99 // pred_check
        %p791 = pneg %p790
      $region102: #{bert_regressor_forward.1} parent=99 // pred_check_branch
        %793 = sbr.rel (%p791) target = $region104
      $region103: #{bert_regressor_forward.1} parent=99 // pred_region
        %v794 = vld [vmem:[%s0] sm:$0xff]
        %v795 = vld [vmem:[%s0 + $0x8] sm:$0xff]
        %v796 = vld [vmem:[%s2] sm:$0x1]
        %v797 = vld [vmem:[%s3] sm:$0x1]
        %vm798 = vcmask 261120
        %v799 = vsel %vm798, %v794, 0.0
        %800 = vadd.xlane.f32.xlu0 %v799
        %v801 = vpop.xlane.xlu0 %800
        %v802 = vsel %vm798, %v795, 0.0
        %803 = vadd.xlane.f32.xlu0 %v802
        %v804 = vpop.xlane.xlu0 %803
        %v805 = vrcp.pop 32.0
        %v806 = vmul.f32 %v801, %v805
        %v807 = vmul.f32 %v804, %v805
        %v808 = vsub.f32 %v794, %v806
        %v809 = vsub.f32 %v795, %v807
        %v810 = vmul.f32 %v808, %v808
        %v811 = vmul.f32 %v809, %v809
        %v812 = vsel %vm798, %v810, 0.0
        %813 = vadd.xlane.f32.xlu0 %v812
        %v814 = vpop.xlane.xlu0 %813
        %v815 = vsel %vm798, %v811, 0.0
        %816 = vadd.xlane.f32.xlu0 %v815
        %v817 = vpop.xlane.xlu0 %816
        %v818 = vmul.f32 %v814, %v805
        %v819 = vmul.f32 %v817, %v805
        %v820 = vadd.f32 %v818, 1e-12
        %v821 = vadd.f32 %v819, 1e-12
        %v822 = vrsqrt.pop %v820
        %v823 = vrsqrt.pop %v821
        %v824 = vmul.f32 %v808, %v822
        %v825 = vmul.f32 %v809, %v823
        %v827 = vlaneseq
        %v828 = vshrl.u32 %v827, 7
        %v829 = vsub.s32 0, %v828
        %v830 = vrot.slane %v796, %v829
        %v832 = vmul.f32 %v824, %v830
        %v833 = vmul.f32 %v825, %v830
        %v835 = vlaneseq
        %v836 = vshrl.u32 %v835, 7
        %v837 = vsub.s32 0, %v836
        %v838 = vrot.slane %v797, %v837
        %v840 = vadd.f32 %v832, %v838
        %v841 = vadd.f32 %v833, %v838
        %842 = vst.msk [vmem:[#allocation2] sm:$0xff] %vm798, %v840
        %843 = vst.msk [vmem:[#allocation2 + $0x8] sm:$0xff] %vm798, %v841
      $region104: #{bert_regressor_forward.1} parent=99 // pred_fallthru
        _
      %v844 = vld [vmem:[#allocation2] sm:$0xff]
      %v845 = vld [vmem:[#allocation2 + $0x8] sm:$0xff]
      %v846 = vpack.c.bf16 %v845, %v844
      %v847 = vld [vmem:[%s749] sm:$0xf]
      %v848 = vld [vmem:[%s749 + $0x4] sm:$0xf]
      %v849 = vld [vmem:[%s749 + $0x8] sm:$0xf]
      %v850 = vld [vmem:[%s749 + $0xc] sm:$0xf]
      %v851 = vld [vmem:[%s752] sm:$0x1]
      %v853 = vlaneseq
      %v854 = vshrl.u32 %v853, 7
      %v855 = vsub.s32 0, %v854
      %v856 = vrot.slane %v851, %v855
      %v862 = vunpack.c.l.b16 %v847
      %v863 = vunpack.c.l.b16 %v848
      %v864 = vunpack.c.l.b16 %v849
      %v865 = vunpack.c.l.b16 %v850
      %v866 = vpack.c.b16 %v863, %v862
      %v867 = vpack.c.b16 %v865, %v864
      %vm870 = vcmask 261120
      %v872 = vsel %vm870, %v846, 0
      %874 = vmatprep.subr.bf16.mxu0 0
      %875 = vmatpush1.bf16.msra.mxu0 0
      %876 = vmatprep.subr.bf16.mxu0 0
      %877 = vmatpush1.bf16.msra.mxu0 0
      %878 = vmatprep.subr.bf16.mxu0 0
      %879 = vmatpush1.bf16.msra.mxu0 0
      %880 = vmatprep.subr.bf16.mxu0 0
      %881 = vmatpush1.bf16.msra.mxu0 0
      %882 = vmatprep.subr.bf16.mxu0 0
      %883 = vmatpush1.bf16.msra.mxu0 0
      %884 = vmatprep.subr.bf16.mxu0 0
      %885 = vmatpush1.bf16.msra.mxu0 0
      %886 = vmatprep.subr.bf16.mxu0 0
      %887 = vmatpush1.bf16.msra.mxu0 %v867
      %888 = vmatprep.subr.bf16.mxu0 0
      %889 = vmatpush1.bf16.msra.mxu0 %v866
      %890 = vmatprep.subr.bf16.mxu0 0
      %891 = vmatpush2.bf16.msra.mxu0 0
      %892 = vmatprep.subr.bf16.mxu0 0
      %893 = vmatpush2.bf16.msra.mxu0 0
      %894 = vmatprep.subr.bf16.mxu0 0
      %895 = vmatpush2.bf16.msra.mxu0 0
      %896 = vmatprep.subr.bf16.mxu0 0
      %897 = vmatpush2.bf16.msra.mxu0 0
      %898 = vmatprep.subr.bf16.mxu0 0
      %899 = vmatpush2.bf16.msra.mxu0 0
      %900 = vmatprep.subr.bf16.mxu0 0
      %901 = vmatpush2.bf16.msra.mxu0 0
      %902 = vmatprep.subr.bf16.mxu0 0
      %903 = vmatpush2.bf16.msra.mxu0 0
      %904 = vmatprep.subr.bf16.mxu0 0
      %905 = vmatpush2.bf16.msra.mxu0 0
      %906 = vmatprep.mubr.bf16.mxu0 0
      %907 = vmatmul.mubr.bf16.gmra.mxu0 %v872
      %v908 = vpop.f32.mrf.mxu0
      %v909 = vadd.f32 %v856, %v908
      %v910 = vpop.f32.mrf.mxu0
      %v911 = vpop.f32.mrf.mxu0
      %v912 = vadd.f32 %v856, %v911
      %v913 = vpop.f32.mrf.mxu0
      %914 = vdwg.mxu0
      %v915 = vld [vmem:[%s1] sm:$0x1]
      %v916 = vld [vmem:[%s1 + $0x1] sm:$0x1]
      %v919 = vlaneseq
      %v920 = vshrl.u32 %v919, 7
      %v921 = vsub.s32 0, %v920
      %v922 = vrot.slane %v915, %v921
      %v923 = vlaneseq
      %v924 = vshrl.u32 %v923, 7
      %v925 = vsub.s32 0, %v924
      %v926 = vrot.slane %v916, %v925
      %v929 = vld [vmem:[%s757] sm:$0xf]
      %v930 = vld [vmem:[%s757 + $0x4] sm:$0xf]
      %v931 = vld [vmem:[%s757 + $0x8] sm:$0xf]
      %v932 = vld [vmem:[%s757 + $0xc] sm:$0xf]
      %v933 = vpack.c.bf16 %v909, %v909
      %v934 = vpack.c.bf16 %v912, %v912
      %936 = vrot.lane.b32.xlu0 %v933, 96
      %v937 = vpop.permute.xlu0 %936
      %vm938 = vcmask 130048
      %v940 = vsel %vm938, %v933, 0
      %v943 = vsel %vm938, %v937, 0
      %945 = vmatprep.subr.bf16.mxu0 0
      %946 = vmatpush1.bf16.xpose.msra.mxu0 0
      %947 = vmatprep.subr.bf16.mxu0 0
      %948 = vmatpush1.bf16.xpose.msra.mxu0 0
      %949 = vmatprep.subr.bf16.mxu0 0
      %950 = vmatpush1.bf16.xpose.msra.mxu0 0
      %951 = vmatprep.subr.bf16.mxu0 0
      %952 = vmatpush1.bf16.xpose.msra.mxu0 0
      %953 = vmatprep.subr.bf16.mxu0 0
      %954 = vmatpush1.bf16.xpose.msra.mxu0 0
      %955 = vmatprep.subr.bf16.mxu0 0
      %956 = vmatpush1.bf16.xpose.msra.mxu0 0
      %957 = vmatprep.subr.bf16.mxu0 0
      %958 = vmatpush1.bf16.xpose.msra.mxu0 0
      %959 = vmatprep.subr.bf16.mxu0 0
      %960 = vmatpush1.bf16.xpose.msra.mxu0 %v943
      %961 = vmatprep.subr.bf16.mxu0 0
      %962 = vmatpush2.bf16.xpose.msra.mxu0 0
      %963 = vmatprep.subr.bf16.mxu0 0
      %964 = vmatpush2.bf16.xpose.msra.mxu0 0
      %965 = vmatprep.subr.bf16.mxu0 0
      %966 = vmatpush2.bf16.xpose.msra.mxu0 0
      %967 = vmatprep.subr.bf16.mxu0 0
      %968 = vmatpush2.bf16.xpose.msra.mxu0 0
      %969 = vmatprep.subr.bf16.mxu0 0
      %970 = vmatpush2.bf16.xpose.msra.mxu0 0
      %971 = vmatprep.subr.bf16.mxu0 0
      %972 = vmatpush2.bf16.xpose.msra.mxu0 0
      %973 = vmatprep.subr.bf16.mxu0 0
      %974 = vmatpush2.bf16.xpose.msra.mxu0 0
      %975 = vmatprep.subr.bf16.mxu0 0
      %976 = vmatpush2.bf16.xpose.msra.mxu0 0
      %977 = vmatprep.mubr.bf16.mxu0 0
      %978 = vmatmul.mubr.bf16.gmra.mxu0 %v940
      %v979 = vpop.f32.mrf.mxu0
      %v980 = vadd.f32 0.0, %v979
      %v981 = vpop.f32.mrf.mxu0
      %v982 = vpop.f32.mrf.mxu0
      %v983 = vpop.f32.mrf.mxu0
      %984 = vdwg.mxu0
      %986 = vrot.lane.b32.xlu0 %v934, 96
      %v987 = vpop.permute.xlu0 %986
      %v989 = vsel %vm938, %v934, 0
      %v992 = vsel %vm938, %v987, 0
      %994 = vmatprep.subr.bf16.mxu0 0
      %995 = vmatpush1.bf16.xpose.msra.mxu0 0
      %996 = vmatprep.subr.bf16.mxu0 0
      %997 = vmatpush1.bf16.xpose.msra.mxu0 0
      %998 = vmatprep.subr.bf16.mxu0 0
      %999 = vmatpush1.bf16.xpose.msra.mxu0 0
      %1000 = vmatprep.subr.bf16.mxu0 0
      %1001 = vmatpush1.bf16.xpose.msra.mxu0 0
      %1002 = vmatprep.subr.bf16.mxu0 0
      %1003 = vmatpush1.bf16.xpose.msra.mxu0 0
      %1004 = vmatprep.subr.bf16.mxu0 0
      %1005 = vmatpush1.bf16.xpose.msra.mxu0 0
      %1006 = vmatprep.subr.bf16.mxu0 0
      %1007 = vmatpush1.bf16.xpose.msra.mxu0 0
      %1008 = vmatprep.subr.bf16.mxu0 0
      %1009 = vmatpush1.bf16.xpose.msra.mxu0 %v992
      %1010 = vmatprep.subr.bf16.mxu0 0
      %1011 = vmatpush2.bf16.xpose.msra.mxu0 0
      %1012 = vmatprep.subr.bf16.mxu0 0
      %1013 = vmatpush2.bf16.xpose.msra.mxu0 0
      %1014 = vmatprep.subr.bf16.mxu0 0
      %1015 = vmatpush2.bf16.xpose.msra.mxu0 0
      %1016 = vmatprep.subr.bf16.mxu0 0
      %1017 = vmatpush2.bf16.xpose.msra.mxu0 0
      %1018 = vmatprep.subr.bf16.mxu0 0
      %1019 = vmatpush2.bf16.xpose.msra.mxu0 0
      %1020 = vmatprep.subr.bf16.mxu0 0
      %1021 = vmatpush2.bf16.xpose.msra.mxu0 0
      %1022 = vmatprep.subr.bf16.mxu0 0
      %1023 = vmatpush2.bf16.xpose.msra.mxu0 0
      %1024 = vmatprep.subr.bf16.mxu0 0
      %1025 = vmatpush2.bf16.xpose.msra.mxu0 0
      %1026 = vmatprep.mubr.bf16.mxu0 0
      %1027 = vmatmul.mubr.bf16.gmra.mxu0 %v989
      %v1028 = vpop.f32.mrf.mxu0
      %v1029 = vadd.f32 0.0, %v1028
      %v1030 = vpop.f32.mrf.mxu0
      %v1031 = vpop.f32.mrf.mxu0
      %v1032 = vpop.f32.mrf.mxu0
      %1033 = vdwg.mxu0
      %v1034 = vmul.f32 %v980, 0.25
      %v1035 = vmul.f32 %v1029, 0.25
      %v1036 = vadd.f32 %v1034, %v922
      %v1037 = vadd.f32 %v1035, %v926
      %vm1038 = vcmask 64512
      %v1039 = vsel %vm1038, %v1036, -inf
      %1040 = vmax.xlane.f32.xlu0 %v1039
      %v1041 = vpop.xlane.xlu0 %1040
      %v1042 = vsel %vm1038, %v1037, -inf
      %1043 = vmax.xlane.f32.xlu0 %v1042
      %v1044 = vpop.xlane.xlu0 %1043
      %v1045 = vsub.f32 %v1036, %v1041
      %v1046 = vsub.f32 %v1037, %v1044
      %v1047 = vmul.f32 %v1045, 1.442695
      %v1048 = vpow.pop %v1047
      %v1049 = vmul.f32 %v1046, 1.442695
      %v1050 = vpow.pop %v1049
      %v1051 = vsel %vm1038, %v1048, 0.0
      %1052 = vadd.xlane.f32.xlu0 %v1051
      %v1053 = vpop.xlane.xlu0 %1052
      %v1054 = vsel %vm1038, %v1050, 0.0
      %1055 = vadd.xlane.f32.xlu0 %v1054
      %v1056 = vpop.xlane.xlu0 %1055
      %v1057 = vrcp.pop %v1053
      %v1058 = vrcp.pop %v1056
      %v1059 = vmul.f32 %v1048, %v1057
      %v1060 = vmul.f32 %v1050, %v1058
      %v1061 = vpack.c.bf16 %v1059, %v1059
      %v1062 = vpack.c.bf16 %v1060, %v1060
      %1063 = vrot.lane.b32.xlu0 %v933, 64
      %v1064 = vpop.permute.xlu0 %1063
      %v1066 = vsel %vm1038, %v1061, 0
      %vm1068 = vcmask 1043456
      %v1070 = vsel %vm1068, %v1064, 0
      %1072 = vmatprep.subr.bf16.mxu0 0
      %1073 = vmatpush1.bf16.msra.mxu0 0
      %1074 = vmatprep.subr.bf16.mxu0 0
      %1075 = vmatpush1.bf16.msra.mxu0 0
      %1076 = vmatprep.subr.bf16.mxu0 0
      %1077 = vmatpush1.bf16.msra.mxu0 0
      %1078 = vmatprep.subr.bf16.mxu0 0
      %1079 = vmatpush1.bf16.msra.mxu0 0
      %1080 = vmatprep.subr.bf16.mxu0 0
      %1081 = vmatpush1.bf16.msra.mxu0 0
      %1082 = vmatprep.subr.bf16.mxu0 0
      %1083 = vmatpush1.bf16.msra.mxu0 0
      %1084 = vmatprep.subr.bf16.mxu0 0
      %1085 = vmatpush1.bf16.msra.mxu0 0
      %1086 = vmatprep.subr.bf16.mxu0 0
      %1087 = vmatpush1.bf16.msra.mxu0 %v1070
      %1088 = vmatprep.subr.bf16.mxu0 0
      %1089 = vmatpush2.bf16.msra.mxu0 0
      %1090 = vmatprep.subr.bf16.mxu0 0
      %1091 = vmatpush2.bf16.msra.mxu0 0
      %1092 = vmatprep.subr.bf16.mxu0 0
      %1093 = vmatpush2.bf16.msra.mxu0 0
      %1094 = vmatprep.subr.bf16.mxu0 0
      %1095 = vmatpush2.bf16.msra.mxu0 0
      %1096 = vmatprep.subr.bf16.mxu0 0
      %1097 = vmatpush2.bf16.msra.mxu0 0
      %1098 = vmatprep.subr.bf16.mxu0 0
      %1099 = vmatpush2.bf16.msra.mxu0 0
      %1100 = vmatprep.subr.bf16.mxu0 0
      %1101 = vmatpush2.bf16.msra.mxu0 0
      %1102 = vmatprep.subr.bf16.mxu0 0
      %1103 = vmatpush2.bf16.msra.mxu0 0
      %1104 = vmatprep.mubr.bf16.mxu0 0
      %1105 = vmatmul.mubr.bf16.gmra.mxu0 %v1066
      %v1106 = vpop.f32.mrf.mxu0
      %v1107 = vadd.f32 0.0, %v1106
      %v1108 = vpop.f32.mrf.mxu0
      %v1109 = vpop.f32.mrf.mxu0
      %v1110 = vpop.f32.mrf.mxu0
      %1111 = vdwg.mxu0
      %1112 = vrot.lane.b32.xlu0 %v934, 64
      %v1113 = vpop.permute.xlu0 %1112
      %v1115 = vsel %vm1038, %v1062, 0
      %v1118 = vsel %vm1068, %v1113, 0
      %1120 = vmatprep.subr.bf16.mxu0 0
      %1121 = vmatpush1.bf16.msra.mxu0 0
      %1122 = vmatprep.subr.bf16.mxu0 0
      %1123 = vmatpush1.bf16.msra.mxu0 0
      %1124 = vmatprep.subr.bf16.mxu0 0
      %1125 = vmatpush1.bf16.msra.mxu0 0
      %1126 = vmatprep.subr.bf16.mxu0 0
      %1127 = vmatpush1.bf16.msra.mxu0 0
      %1128 = vmatprep.subr.bf16.mxu0 0
      %1129 = vmatpush1.bf16.msra.mxu0 0
      %1130 = vmatprep.subr.bf16.mxu0 0
      %1131 = vmatpush1.bf16.msra.mxu0 0
      %1132 = vmatprep.subr.bf16.mxu0 0
      %1133 = vmatpush1.bf16.msra.mxu0 0
      %1134 = vmatprep.subr.bf16.mxu0 0
      %1135 = vmatpush1.bf16.msra.mxu0 %v1118
      %1136 = vmatprep.subr.bf16.mxu0 0
      %1137 = vmatpush2.bf16.msra.mxu0 0
      %1138 = vmatprep.subr.bf16.mxu0 0
      %1139 = vmatpush2.bf16.msra.mxu0 0
      %1140 = vmatprep.subr.bf16.mxu0 0
      %1141 = vmatpush2.bf16.msra.mxu0 0
      %1142 = vmatprep.subr.bf16.mxu0 0
      %1143 = vmatpush2.bf16.msra.mxu0 0
      %1144 = vmatprep.subr.bf16.mxu0 0
      %1145 = vmatpush2.bf16.msra.mxu0 0
      %1146 = vmatprep.subr.bf16.mxu0 0
      %1147 = vmatpush2.bf16.msra.mxu0 0
      %1148 = vmatprep.subr.bf16.mxu0 0
      %1149 = vmatpush2.bf16.msra.mxu0 0
      %1150 = vmatprep.subr.bf16.mxu0 0
      %1151 = vmatpush2.bf16.msra.mxu0 0
      %1152 = vmatprep.mubr.bf16.mxu0 0
      %1153 = vmatmul.mubr.bf16.gmra.mxu0 %v1115
      %v1154 = vpop.f32.mrf.mxu0
      %v1155 = vadd.f32 0.0, %v1154
      %v1156 = vpop.f32.mrf.mxu0
      %v1157 = vpop.f32.mrf.mxu0
      %v1158 = vpop.f32.mrf.mxu0
      %1159 = vdwg.mxu0
      %v1160 = vpack.c.bf16 %v1155, %v1107
      %1161 = vrot.lane.b32.xlu0 %v933, 112
      %v1162 = vpop.permute.xlu0 %1161
      %1163 = vrot.lane.b32.xlu0 %v933, 80
      %v1164 = vpop.permute.xlu0 %1163
      %v1166 = vsel %vm938, %v1162, 0
      %v1169 = vsel %vm938, %v1164, 0
      %1171 = vmatprep.subr.bf16.mxu0 0
      %1172 = vmatpush1.bf16.xpose.msra.mxu0 0
      %1173 = vmatprep.subr.bf16.mxu0 0
      %1174 = vmatpush1.bf16.xpose.msra.mxu0 0
      %1175 = vmatprep.subr.bf16.mxu0 0
      %1176 = vmatpush1.bf16.xpose.msra.mxu0 0
      %1177 = vmatprep.subr.bf16.mxu0 0
      %1178 = vmatpush1.bf16.xpose.msra.mxu0 0
      %1179 = vmatprep.subr.bf16.mxu0 0
      %1180 = vmatpush1.bf16.xpose.msra.mxu0 0
      %1181 = vmatprep.subr.bf16.mxu0 0
      %1182 = vmatpush1.bf16.xpose.msra.mxu0 0
      %1183 = vmatprep.subr.bf16.mxu0 0
      %1184 = vmatpush1.bf16.xpose.msra.mxu0 0
      %1185 = vmatprep.subr.bf16.mxu0 0
      %1186 = vmatpush1.bf16.xpose.msra.mxu0 %v1169
      %1187 = vmatprep.subr.bf16.mxu0 0
      %1188 = vmatpush2.bf16.xpose.msra.mxu0 0
      %1189 = vmatprep.subr.bf16.mxu0 0
      %1190 = vmatpush2.bf16.xpose.msra.mxu0 0
      %1191 = vmatprep.subr.bf16.mxu0 0
      %1192 = vmatpush2.bf16.xpose.msra.mxu0 0
      %1193 = vmatprep.subr.bf16.mxu0 0
      %1194 = vmatpush2.bf16.xpose.msra.mxu0 0
      %1195 = vmatprep.subr.bf16.mxu0 0
      %1196 = vmatpush2.bf16.xpose.msra.mxu0 0
      %1197 = vmatprep.subr.bf16.mxu0 0
      %1198 = vmatpush2.bf16.xpose.msra.mxu0 0
      %1199 = vmatprep.subr.bf16.mxu0 0
      %1200 = vmatpush2.bf16.xpose.msra.mxu0 0
      %1201 = vmatprep.subr.bf16.mxu0 0
      %1202 = vmatpush2.bf16.xpose.msra.mxu0 0
      %1203 = vmatprep.mubr.bf16.mxu0 0
      %1204 = vmatmul.mubr.bf16.gmra.mxu0 %v1166
      %v1205 = vpop.f32.mrf.mxu0
      %v1206 = vadd.f32 0.0, %v1205
      %v1207 = vpop.f32.mrf.mxu0
      %v1208 = vpop.f32.mrf.mxu0
      %v1209 = vpop.f32.mrf.mxu0
      %1210 = vdwg.mxu0
      %1211 = vrot.lane.b32.xlu0 %v934, 112
      %v1212 = vpop.permute.xlu0 %1211
      %1213 = vrot.lane.b32.xlu0 %v934, 80
      %v1214 = vpop.permute.xlu0 %1213
      %v1216 = vsel %vm938, %v1212, 0
      %v1219 = vsel %vm938, %v1214, 0
      %1221 = vmatprep.subr.bf16.mxu0 0
      %1222 = vmatpush1.bf16.xpose.msra.mxu0 0
      %1223 = vmatprep.subr.bf16.mxu0 0
      %1224 = vmatpush1.bf16.xpose.msra.mxu0 0
      %1225 = vmatprep.subr.bf16.mxu0 0
      %1226 = vmatpush1.bf16.xpose.msra.mxu0 0
      %1227 = vmatprep.subr.bf16.mxu0 0
      %1228 = vmatpush1.bf16.xpose.msra.mxu0 0
      %1229 = vmatprep.subr.bf16.mxu0 0
      %1230 = vmatpush1.bf16.xpose.msra.mxu0 0
      %1231 = vmatprep.subr.bf16.mxu0 0
      %1232 = vmatpush1.bf16.xpose.msra.mxu0 0
      %1233 = vmatprep.subr.bf16.mxu0 0
      %1234 = vmatpush1.bf16.xpose.msra.mxu0 0
      %1235 = vmatprep.subr.bf16.mxu0 0
      %1236 = vmatpush1.bf16.xpose.msra.mxu0 %v1219
      %1237 = vmatprep.subr.bf16.mxu0 0
      %1238 = vmatpush2.bf16.xpose.msra.mxu0 0
      %1239 = vmatprep.subr.bf16.mxu0 0
      %1240 = vmatpush2.bf16.xpose.msra.mxu0 0
      %1241 = vmatprep.subr.bf16.mxu0 0
      %1242 = vmatpush2.bf16.xpose.msra.mxu0 0
      %1243 = vmatprep.subr.bf16.mxu0 0
      %1244 = vmatpush2.bf16.xpose.msra.mxu0 0
      %1245 = vmatprep.subr.bf16.mxu0 0
      %1246 = vmatpush2.bf16.xpose.msra.mxu0 0
      %1247 = vmatprep.subr.bf16.mxu0 0
      %1248 = vmatpush2.bf16.xpose.msra.mxu0 0
      %1249 = vmatprep.subr.bf16.mxu0 0
      %1250 = vmatpush2.bf16.xpose.msra.mxu0 0
      %1251 = vmatprep.subr.bf16.mxu0 0
      %1252 = vmatpush2.bf16.xpose.msra.mxu0 0
      %1253 = vmatprep.mubr.bf16.mxu0 0
      %1254 = vmatmul.mubr.bf16.gmra.mxu0 %v1216
      %v1255 = vpop.f32.mrf.mxu0
      %v1256 = vadd.f32 0.0, %v1255
      %v1257 = vpop.f32.mrf.mxu0
      %v1258 = vpop.f32.mrf.mxu0
      %v1259 = vpop.f32.mrf.mxu0
      %1260 = vdwg.mxu0
      %v1261 = vmul.f32 %v1206, 0.25
      %v1262 = vmul.f32 %v1256, 0.25
      %v1263 = vadd.f32 %v1261, %v922
      %v1264 = vadd.f32 %v1262, %v926
      %v1265 = vsel %vm1038, %v1263, -inf
      %1266 = vmax.xlane.f32.xlu0 %v1265
      %v1267 = vpop.xlane.xlu0 %1266
      %v1268 = vsel %vm1038, %v1264, -inf
      %1269 = vmax.xlane.f32.xlu0 %v1268
      %v1270 = vpop.xlane.xlu0 %1269
      %v1271 = vsub.f32 %v1263, %v1267
      %v1272 = vsub.f32 %v1264, %v1270
      %v1273 = vmul.f32 %v1271, 1.442695
      %v1274 = vpow.pop %v1273
      %v1275 = vmul.f32 %v1272, 1.442695
      %v1276 = vpow.pop %v1275
      %v1277 = vsel %vm1038, %v1274, 0.0
      %1278 = vadd.xlane.f32.xlu0 %v1277
      %v1279 = vpop.xlane.xlu0 %1278
      %v1280 = vsel %vm1038, %v1276, 0.0
      %1281 = vadd.xlane.f32.xlu0 %v1280
      %v1282 = vpop.xlane.xlu0 %1281
      %v1283 = vrcp.pop %v1279
      %v1284 = vrcp.pop %v1282
      %v1285 = vmul.f32 %v1274, %v1283
      %v1286 = vmul.f32 %v1276, %v1284
      %v1287 = vpack.c.bf16 %v1285, %v1285
      %v1288 = vpack.c.bf16 %v1286, %v1286
      %1289 = vrot.lane.b32.xlu0 %v933, 48
      %v1290 = vpop.permute.xlu0 %1289
      %v1292 = vsel %vm1038, %v1287, 0
      %v1295 = vsel %vm1068, %v1290, 0
      %1297 = vmatprep.subr.bf16.mxu0 0
      %1298 = vmatpush1.bf16.msra.mxu0 0
      %1299 = vmatprep.subr.bf16.mxu0 0
      %1300 = vmatpush1.bf16.msra.mxu0 0
      %1301 = vmatprep.subr.bf16.mxu0 0
      %1302 = vmatpush1.bf16.msra.mxu0 0
      %1303 = vmatprep.subr.bf16.mxu0 0
      %1304 = vmatpush1.bf16.msra.mxu0 0
      %1305 = vmatprep.subr.bf16.mxu0 0
      %1306 = vmatpush1.bf16.msra.mxu0 0
      %1307 = vmatprep.subr.bf16.mxu0 0
      %1308 = vmatpush1.bf16.msra.mxu0 0
      %1309 = vmatprep.subr.bf16.mxu0 0
      %1310 = vmatpush1.bf16.msra.mxu0 0
      %1311 = vmatprep.subr.bf16.mxu0 0
      %1312 = vmatpush1.bf16.msra.mxu0 %v1295
      %1313 = vmatprep.subr.bf16.mxu0 0
      %1314 = vmatpush2.bf16.msra.mxu0 0
      %1315 = vmatprep.subr.bf16.mxu0 0
      %1316 = vmatpush2.bf16.msra.mxu0 0
      %1317 = vmatprep.subr.bf16.mxu0 0
      %1318 = vmatpush2.bf16.msra.mxu0 0
      %1319 = vmatprep.subr.bf16.mxu0 0
      %1320 = vmatpush2.bf16.msra.mxu0 0
      %1321 = vmatprep.subr.bf16.mxu0 0
      %1322 = vmatpush2.bf16.msra.mxu0 0
      %1323 = vmatprep.subr.bf16.mxu0 0
      %1324 = vmatpush2.bf16.msra.mxu0 0
      %1325 = vmatprep.subr.bf16.mxu0 0
      %1326 = vmatpush2.bf16.msra.mxu0 0
      %1327 = vmatprep.subr.bf16.mxu0 0
      %1328 = vmatpush2.bf16.msra.mxu0 0
      %1329 = vmatprep.mubr.bf16.mxu0 0
      %1330 = vmatmul.mubr.bf16.gmra.mxu0 %v1292
      %v1331 = vpop.f32.mrf.mxu0
      %v1332 = vadd.f32 0.0, %v1331
      %v1333 = vpop.f32.mrf.mxu0
      %v1334 = vpop.f32.mrf.mxu0
      %v1335 = vpop.f32.mrf.mxu0
      %1336 = vdwg.mxu0
      %1337 = vrot.lane.b32.xlu0 %v934, 48
      %v1338 = vpop.permute.xlu0 %1337
      %v1340 = vsel %vm1038, %v1288, 0
      %v1343 = vsel %vm1068, %v1338, 0
      %1345 = vmatprep.subr.bf16.mxu0 0
      %1346 = vmatpush1.bf16.msra.mxu0 0
      %1347 = vmatprep.subr.bf16.mxu0 0
      %1348 = vmatpush1.bf16.msra.mxu0 0
      %1349 = vmatprep.subr.bf16.mxu0 0
      %1350 = vmatpush1.bf16.msra.mxu0 0
      %1351 = vmatprep.subr.bf16.mxu0 0
      %1352 = vmatpush1.bf16.msra.mxu0 0
      %1353 = vmatprep.subr.bf16.mxu0 0
      %1354 = vmatpush1.bf16.msra.mxu0 0
      %1355 = vmatprep.subr.bf16.mxu0 0
      %1356 = vmatpush1.bf16.msra.mxu0 0
      %1357 = vmatprep.subr.bf16.mxu0 0
      %1358 = vmatpush1.bf16.msra.mxu0 0
      %1359 = vmatprep.subr.bf16.mxu0 0
      %1360 = vmatpush1.bf16.msra.mxu0 %v1343
      %1361 = vmatprep.subr.bf16.mxu0 0
      %1362 = vmatpush2.bf16.msra.mxu0 0
      %1363 = vmatprep.subr.bf16.mxu0 0
      %1364 = vmatpush2.bf16.msra.mxu0 0
      %1365 = vmatprep.subr.bf16.mxu0 0
      %1366 = vmatpush2.bf16.msra.mxu0 0
      %1367 = vmatprep.subr.bf16.mxu0 0
      %1368 = vmatpush2.bf16.msra.mxu0 0
      %1369 = vmatprep.subr.bf16.mxu0 0
      %1370 = vmatpush2.bf16.msra.mxu0 0
      %1371 = vmatprep.subr.bf16.mxu0 0
      %1372 = vmatpush2.bf16.msra.mxu0 0
      %1373 = vmatprep.subr.bf16.mxu0 0
      %1374 = vmatpush2.bf16.msra.mxu0 0
      %1375 = vmatprep.subr.bf16.mxu0 0
      %1376 = vmatpush2.bf16.msra.mxu0 0
      %1377 = vmatprep.mubr.bf16.mxu0 0
      %1378 = vmatmul.mubr.bf16.gmra.mxu0 %v1340
      %v1379 = vpop.f32.mrf.mxu0
      %v1380 = vadd.f32 0.0, %v1379
      %v1381 = vpop.f32.mrf.mxu0
      %v1382 = vpop.f32.mrf.mxu0
      %v1383 = vpop.f32.mrf.mxu0
      %1384 = vdwg.mxu0
      %v1385 = vpack.c.bf16 %v1380, %v1332
      %v1388 = vunpack.c.l.b16 %v931
      %v1389 = vunpack.c.l.b16 %v932
      %v1390 = vpack.c.b16 %v1389, %v1388
      %v1393 = vsel %vm938, %v1385, 0
      %1395 = vmatprep.subr.bf16.mxu0 0
      %1396 = vmatpush1.bf16.msra.mxu0 0
      %1397 = vmatprep.subr.bf16.mxu0 0
      %1398 = vmatpush1.bf16.msra.mxu0 0
      %1399 = vmatprep.subr.bf16.mxu0 0
      %1400 = vmatpush1.bf16.msra.mxu0 0
      %1401 = vmatprep.subr.bf16.mxu0 0
      %1402 = vmatpush1.bf16.msra.mxu0 0
      %1403 = vmatprep.subr.bf16.mxu0 0
      %1404 = vmatpush1.bf16.msra.mxu0 0
      %1405 = vmatprep.subr.bf16.mxu0 0
      %1406 = vmatpush1.bf16.msra.mxu0 0
      %1407 = vmatprep.subr.bf16.mxu0 0
      %1408 = vmatpush1.bf16.msra.mxu0 0
      %1409 = vmatprep.subr.bf16.mxu0 0
      %1410 = vmatpush1.bf16.msra.mxu0 %v1390
      %1411 = vmatprep.subr.bf16.mxu0 0
      %1412 = vmatpush2.bf16.msra.mxu0 0
      %1413 = vmatprep.subr.bf16.mxu0 0
      %1414 = vmatpush2.bf16.msra.mxu0 0
      %1415 = vmatprep.subr.bf16.mxu0 0
      %1416 = vmatpush2.bf16.msra.mxu0 0
      %1417 = vmatprep.subr.bf16.mxu0 0
      %1418 = vmatpush2.bf16.msra.mxu0 0
      %1419 = vmatprep.subr.bf16.mxu0 0
      %1420 = vmatpush2.bf16.msra.mxu0 0
      %1421 = vmatprep.subr.bf16.mxu0 0
      %1422 = vmatpush2.bf16.msra.mxu0 0
      %1423 = vmatprep.subr.bf16.mxu0 0
      %1424 = vmatpush2.bf16.msra.mxu0 0
      %1425 = vmatprep.subr.bf16.mxu0 0
      %1426 = vmatpush2.bf16.msra.mxu0 0
      %1427 = vmatprep.mubr.bf16.mxu0 0
      %1428 = vmatmul.mubr.bf16.gmra.mxu0 %v1393
      %v1429 = vpop.f32.mrf.mxu0
      %v1430 = vadd.f32 0.0, %v1429
      %v1431 = vpop.f32.mrf.mxu0
      %v1432 = vpop.f32.mrf.mxu0
      %v1433 = vadd.f32 0.0, %v1432
      %v1434 = vpop.f32.mrf.mxu0
      %1435 = vdwg.mxu0
      %v1438 = vunpack.c.l.b16 %v929
      %v1439 = vunpack.c.l.b16 %v930
      %v1440 = vpack.c.b16 %v1439, %v1438
      %v1443 = vsel %vm938, %v1160, 0
      %1445 = vmatprep.subr.bf16.mxu0 0
      %1446 = vmatpush1.bf16.msra.mxu0 0
      %1447 = vmatprep.subr.bf16.mxu0 0
      %1448 = vmatpush1.bf16.msra.mxu0 0
      %1449 = vmatprep.subr.bf16.mxu0 0
      %1450 = vmatpush1.bf16.msra.mxu0 0
      %1451 = vmatprep.subr.bf16.mxu0 0
      %1452 = vmatpush1.bf16.msra.mxu0 0
      %1453 = vmatprep.subr.bf16.mxu0 0
      %1454 = vmatpush1.bf16.msra.mxu0 0
      %1455 = vmatprep.subr.bf16.mxu0 0
      %1456 = vmatpush1.bf16.msra.mxu0 0
      %1457 = vmatprep.subr.bf16.mxu0 0
      %1458 = vmatpush1.bf16.msra.mxu0 0
      %1459 = vmatprep.subr.bf16.mxu0 0
      %1460 = vmatpush1.bf16.msra.mxu0 %v1440
      %1461 = vmatprep.subr.bf16.mxu0 0
      %1462 = vmatpush2.bf16.msra.mxu0 0
      %1463 = vmatprep.subr.bf16.mxu0 0
      %1464 = vmatpush2.bf16.msra.mxu0 0
      %1465 = vmatprep.subr.bf16.mxu0 0
      %1466 = vmatpush2.bf16.msra.mxu0 0
      %1467 = vmatprep.subr.bf16.mxu0 0
      %1468 = vmatpush2.bf16.msra.mxu0 0
      %1469 = vmatprep.subr.bf16.mxu0 0
      %1470 = vmatpush2.bf16.msra.mxu0 0
      %1471 = vmatprep.subr.bf16.mxu0 0
      %1472 = vmatpush2.bf16.msra.mxu0 0
      %1473 = vmatprep.subr.bf16.mxu0 0
      %1474 = vmatpush2.bf16.msra.mxu0 0
      %1475 = vmatprep.subr.bf16.mxu0 0
      %1476 = vmatpush2.bf16.msra.mxu0 0
      %1477 = vmatprep.mubr.bf16.mxu0 0
      %1478 = vmatmul.mubr.bf16.gmra.mxu0 %v1443
      %v1479 = vpop.f32.mrf.mxu0
      %v1480 = vadd.f32 %v1430, %v1479
      %v1481 = vpop.f32.mrf.mxu0
      %v1482 = vpop.f32.mrf.mxu0
      %v1483 = vadd.f32 %v1433, %v1482
      %v1484 = vpop.f32.mrf.mxu0
      %1485 = vdwg.mxu0
      %v1486 = vld [vmem:[%s760] sm:$0x1]
      %v1488 = vlaneseq
      %v1489 = vshrl.u32 %v1488, 7
      %v1490 = vsub.s32 0, %v1489
      %v1491 = vrot.slane %v1486, %v1490
      %v1493 = vadd.f32 %v1480, %v1491
      %v1494 = vadd.f32 %v1483, %v1491
      %v1495 = vadd.f32 %v1493, %v844
      %v1496 = vadd.f32 %v1494, %v845
      %v1497 = vld [vmem:[%s763] sm:$0x1]
      %v1498 = vld [vmem:[%s766] sm:$0x1]
      %v1499 = vsel %vm870, %v1495, 0.0
      %1500 = vadd.xlane.f32.xlu0 %v1499
      %v1501 = vpop.xlane.xlu0 %1500
      %v1502 = vsel %vm870, %v1496, 0.0
      %1503 = vadd.xlane.f32.xlu0 %v1502
      %v1504 = vpop.xlane.xlu0 %1503
      %v1505 = vrcp.pop 32.0
      %v1506 = vmul.f32 %v1501, %v1505
      %v1507 = vmul.f32 %v1504, %v1505
      %v1508 = vsub.f32 %v1495, %v1506
      %v1509 = vsub.f32 %v1496, %v1507
      %v1510 = vmul.f32 %v1508, %v1508
      %v1511 = vmul.f32 %v1509, %v1509
      %v1512 = vsel %vm870, %v1510, 0.0
      %1513 = vadd.xlane.f32.xlu0 %v1512
      %v1514 = vpop.xlane.xlu0 %1513
      %v1515 = vsel %vm870, %v1511, 0.0
      %1516 = vadd.xlane.f32.xlu0 %v1515
      %v1517 = vpop.xlane.xlu0 %1516
      %v1518 = vmul.f32 %v1514, %v1505
      %v1519 = vmul.f32 %v1517, %v1505
      %v1520 = vadd.f32 %v1518, 1e-12
      %v1521 = vadd.f32 %v1519, 1e-12
      %v1522 = vrsqrt.pop %v1520
      %v1523 = vrsqrt.pop %v1521
      %v1524 = vmul.f32 %v1508, %v1522
      %v1525 = vmul.f32 %v1509, %v1523
      %v1527 = vlaneseq
      %v1528 = vshrl.u32 %v1527, 7
      %v1529 = vsub.s32 0, %v1528
      %v1530 = vrot.slane %v1497, %v1529
      %v1532 = vmul.f32 %v1524, %v1530
      %v1533 = vmul.f32 %v1525, %v1530
      %v1535 = vlaneseq
      %v1536 = vshrl.u32 %v1535, 7
      %v1537 = vsub.s32 0, %v1536
      %v1538 = vrot.slane %v1498, %v1537
      %v1540 = vadd.f32 %v1532, %v1538
      %v1541 = vadd.f32 %v1533, %v1538
      %v1542 = vpack.c.bf16 %v1541, %v1540
      %v1543 = vld [vmem:[%s771] sm:$0xf]
      %v1544 = vld [vmem:[%s771 + $0x4] sm:$0xf]
      %v1545 = vld [vmem:[%s771 + $0x8] sm:$0xf]
      %v1546 = vld [vmem:[%s771 + $0xc] sm:$0xf]
      %v1547 = vld [vmem:[%s774] sm:$0x1]
      %v1549 = vlaneseq
      %v1550 = vshrl.u32 %v1549, 7
      %v1551 = vsub.s32 0, %v1550
      %v1552 = vrot.slane %v1547, %v1551
      %v1558 = vunpack.c.l.b16 %v1543
      %v1559 = vunpack.c.l.b16 %v1544
      %v1560 = vunpack.c.l.b16 %v1545
      %v1561 = vunpack.c.l.b16 %v1546
      %v1562 = vpack.c.b16 %v1559, %v1558
      %v1563 = vpack.c.b16 %v1561, %v1560
      %v1567 = vsel %vm870, %v1542, 0
      %1569 = vmatprep.subr.bf16.mxu0 0
      %1570 = vmatpush1.bf16.msra.mxu0 0
      %1571 = vmatprep.subr.bf16.mxu0 0
      %1572 = vmatpush1.bf16.msra.mxu0 0
      %1573 = vmatprep.subr.bf16.mxu0 0
      %1574 = vmatpush1.bf16.msra.mxu0 0
      %1575 = vmatprep.subr.bf16.mxu0 0
      %1576 = vmatpush1.bf16.msra.mxu0 0
      %1577 = vmatprep.subr.bf16.mxu0 0
      %1578 = vmatpush1.bf16.msra.mxu0 0
      %1579 = vmatprep.subr.bf16.mxu0 0
      %1580 = vmatpush1.bf16.msra.mxu0 0
      %1581 = vmatprep.subr.bf16.mxu0 0
      %1582 = vmatpush1.bf16.msra.mxu0 %v1563
      %1583 = vmatprep.subr.bf16.mxu0 0
      %1584 = vmatpush1.bf16.msra.mxu0 %v1562
      %1585 = vmatprep.subr.bf16.mxu0 0
      %1586 = vmatpush2.bf16.msra.mxu0 0
      %1587 = vmatprep.subr.bf16.mxu0 0
      %1588 = vmatpush2.bf16.msra.mxu0 0
      %1589 = vmatprep.subr.bf16.mxu0 0
      %1590 = vmatpush2.bf16.msra.mxu0 0
      %1591 = vmatprep.subr.bf16.mxu0 0
      %1592 = vmatpush2.bf16.msra.mxu0 0
      %1593 = vmatprep.subr.bf16.mxu0 0
      %1594 = vmatpush2.bf16.msra.mxu0 0
      %1595 = vmatprep.subr.bf16.mxu0 0
      %1596 = vmatpush2.bf16.msra.mxu0 0
      %1597 = vmatprep.subr.bf16.mxu0 0
      %1598 = vmatpush2.bf16.msra.mxu0 0
      %1599 = vmatprep.subr.bf16.mxu0 0
      %1600 = vmatpush2.bf16.msra.mxu0 0
      %1601 = vmatprep.mubr.bf16.mxu0 0
      %1602 = vmatmul.mubr.bf16.gmra.mxu0 %v1567
      %v1603 = vpop.f32.mrf.mxu0
      %v1604 = vadd.f32 %v1552, %v1603
      %v1605 = vpop.f32.mrf.mxu0
      %v1606 = vpop.f32.mrf.mxu0
      %v1607 = vadd.f32 %v1552, %v1606
      %v1608 = vpop.f32.mrf.mxu0
      %1609 = vdwg.mxu0
      %v1610 = vmul.f32 %v1604, 0.5
      %v1611 = vmul.f32 %v1607, 0.5
      %v1612 = vmul.f32 %v1604, 0.70710677
      %v1613 = vmul.f32 %v1607, 0.70710677
      %v1614 = verf.f32.pop %v1612
      %v1615 = verf.f32.pop %v1613
      %v1616 = vadd.f32 %v1614, 1.0
      %v1617 = vadd.f32 %v1615, 1.0
      %v1618 = vmul.f32 %v1610, %v1616
      %v1619 = vmul.f32 %v1611, %v1617
      %v1620 = vpack.c.bf16 %v1619, %v1618
      %v1621 = vld [vmem:[%s779] sm:$0xf]
      %v1622 = vld [vmem:[%s779 + $0x4] sm:$0xf]
      %v1623 = vld [vmem:[%s779 + $0x8] sm:$0xf]
      %v1624 = vld [vmem:[%s779 + $0xc] sm:$0xf]
      %v1625 = vld [vmem:[%s779 + $0x10] sm:$0xf]
      %v1626 = vld [vmem:[%s779 + $0x14] sm:$0xf]
      %v1627 = vld [vmem:[%s779 + $0x18] sm:$0xf]
      %v1628 = vld [vmem:[%s779 + $0x1c] sm:$0xf]
      %v1629 = vld [vmem:[%s782] sm:$0x1]
      %v1631 = vlaneseq
      %v1632 = vshrl.u32 %v1631, 7
      %v1633 = vsub.s32 0, %v1632
      %v1634 = vrot.slane %v1629, %v1633
      %v1644 = vunpack.c.l.b16 %v1621
      %v1645 = vunpack.c.l.b16 %v1622
      %v1646 = vunpack.c.l.b16 %v1623
      %v1647 = vunpack.c.l.b16 %v1624
      %v1648 = vunpack.c.l.b16 %v1625
      %v1649 = vunpack.c.l.b16 %v1626
      %v1650 = vunpack.c.l.b16 %v1627
      %v1651 = vunpack.c.l.b16 %v1628
      %v1652 = vpack.c.b16 %v1645, %v1644
      %v1653 = vpack.c.b16 %v1647, %v1646
      %v1654 = vpack.c.b16 %v1649, %v1648
      %v1655 = vpack.c.b16 %v1651, %v1650
      %vm1660 = vcmask 523264
      %v1662 = vsel %vm1660, %v1620, 0
      %1664 = vmatprep.subr.bf16.mxu0 0
      %1665 = vmatpush1.bf16.msra.mxu0 0
      %1666 = vmatprep.subr.bf16.mxu0 0
      %1667 = vmatpush1.bf16.msra.mxu0 0
      %1668 = vmatprep.subr.bf16.mxu0 0
      %1669 = vmatpush1.bf16.msra.mxu0 0
      %1670 = vmatprep.subr.bf16.mxu0 0
      %1671 = vmatpush1.bf16.msra.mxu0 0
      %1672 = vmatprep.subr.bf16.mxu0 0
      %1673 = vmatpush1.bf16.msra.mxu0 %v1655
      %1674 = vmatprep.subr.bf16.mxu0 0
      %1675 = vmatpush1.bf16.msra.mxu0 %v1654
      %1676 = vmatprep.subr.bf16.mxu0 0
      %1677 = vmatpush1.bf16.msra.mxu0 %v1653
      %1678 = vmatprep.subr.bf16.mxu0 0
      %1679 = vmatpush1.bf16.msra.mxu0 %v1652
      %1680 = vmatprep.subr.bf16.mxu0 0
      %1681 = vmatpush2.bf16.msra.mxu0 0
      %1682 = vmatprep.subr.bf16.mxu0 0
      %1683 = vmatpush2.bf16.msra.mxu0 0
      %1684 = vmatprep.subr.bf16.mxu0 0
      %1685 = vmatpush2.bf16.msra.mxu0 0
      %1686 = vmatprep.subr.bf16.mxu0 0
      %1687 = vmatpush2.bf16.msra.mxu0 0
      %1688 = vmatprep.subr.bf16.mxu0 0
      %1689 = vmatpush2.bf16.msra.mxu0 0
      %1690 = vmatprep.subr.bf16.mxu0 0
      %1691 = vmatpush2.bf16.msra.mxu0 0
      %1692 = vmatprep.subr.bf16.mxu0 0
      %1693 = vmatpush2.bf16.msra.mxu0 0
      %1694 = vmatprep.subr.bf16.mxu0 0
      %1695 = vmatpush2.bf16.msra.mxu0 0
      %1696 = vmatprep.mubr.bf16.mxu0 0
      %1697 = vmatmul.mubr.bf16.gmra.mxu0 %v1662
      %v1698 = vpop.f32.mrf.mxu0
      %v1699 = vadd.f32 %v1634, %v1698
      %v1700 = vpop.f32.mrf.mxu0
      %v1701 = vpop.f32.mrf.mxu0
      %v1702 = vadd.f32 %v1634, %v1701
      %v1703 = vpop.f32.mrf.mxu0
      %1704 = vdwg.mxu0
      %v1705 = vadd.f32 %v1699, %v1540
      %v1706 = vadd.f32 %v1702, %v1541
      %v1707 = vld [vmem:[%s785] sm:$0x1]
      %v1708 = vld [vmem:[%s788] sm:$0x1]
      %v1709 = vsel %vm870, %v1705, 0.0
      %1710 = vadd.xlane.f32.xlu0 %v1709
      %v1711 = vpop.xlane.xlu0 %1710
      %v1712 = vsel %vm870, %v1706, 0.0
      %1713 = vadd.xlane.f32.xlu0 %v1712
      %v1714 = vpop.xlane.xlu0 %1713
      %v1715 = vmul.f32 %v1711, %v1505
      %v1716 = vmul.f32 %v1714, %v1505
      %v1717 = vsub.f32 %v1705, %v1715
      %v1718 = vsub.f32 %v1706, %v1716
      %v1719 = vmul.f32 %v1717, %v1717
      %v1720 = vmul.f32 %v1718, %v1718
      %v1721 = vsel %vm870, %v1719, 0.0
      %1722 = vadd.xlane.f32.xlu0 %v1721
      %v1723 = vpop.xlane.xlu0 %1722
      %v1724 = vsel %vm870, %v1720, 0.0
      %1725 = vadd.xlane.f32.xlu0 %v1724
      %v1726 = vpop.xlane.xlu0 %1725
      %v1727 = vmul.f32 %v1723, %v1505
      %v1728 = vmul.f32 %v1726, %v1505
      %v1729 = vadd.f32 %v1727, 1e-12
      %v1730 = vadd.f32 %v1728, 1e-12
      %v1731 = vrsqrt.pop %v1729
      %v1732 = vrsqrt.pop %v1730
      %v1733 = vmul.f32 %v1717, %v1731
      %v1734 = vmul.f32 %v1718, %v1732
      %v1736 = vlaneseq
      %v1737 = vshrl.u32 %v1736, 7
      %v1738 = vsub.s32 0, %v1737
      %v1739 = vrot.slane %v1707, %v1738
      %v1741 = vmul.f32 %v1733, %v1739
      %v1742 = vmul.f32 %v1734, %v1739
      %v1744 = vlaneseq
      %v1745 = vshrl.u32 %v1744, 7
      %v1746 = vsub.s32 0, %v1745
      %v1747 = vrot.slane %v1708, %v1746
      %v1749 = vadd.f32 %v1741, %v1747
      %v1750 = vadd.f32 %v1742, %v1747
      %1751 = vst.msk [vmem:[#allocation2] sm:$0xff] %vm870, %v1749
      %1752 = vst.msk [vmem:[#allocation2 + $0x8] sm:$0xff] %vm870, %v1750
      %p1753 = scmp.eq.s32.totalorder %s33, 1
      // Predicated region
      $region105: #{bert_regressor_forward.1} parent=99 // pred_check
        %p1754 = pneg %p1753
      $region106: #{bert_regressor_forward.1} parent=99 // pred_check_branch
        %1756 = sbr.rel (%p1754) target = $region108
      $region107: #{bert_regressor_forward.1} parent=99 // pred_region
        %v1757 = vpack.c.bf16 %v1749, %v1749
        %v1758 = vpack.c.bf16 %v1750, %v1750
        %v1759 = vld [vmem:[%s16] sm:$0xf]
        %v1760 = vld [vmem:[%s16 + $0x4] sm:$0xf]
        %v1761 = vld [vmem:[%s16 + $0x8] sm:$0xf]
        %v1762 = vld [vmem:[%s16 + $0xc] sm:$0xf]
        %v1763 = vld [vmem:[%s17] sm:$0x1]
        %v1765 = vlaneseq
        %v1766 = vshrl.u32 %v1765, 7
        %v1767 = vsub.s32 0, %v1766
        %v1768 = vrot.slane %v1763, %v1767
        %v1772 = vunpack.c.l.b16 %v1757
        %v1773 = vunpack.c.l.b16 %v1758
        %v1774 = vrot.slane %v1773, 7
        %vm1775 = vcmask 1041409
        %v1776 = vsel %vm1775, %v1774, %v1772
        %v1777 = vpack.c.b16 %v1776, %v1776
        %v1782 = vunpack.c.l.b16 %v1759
        %v1783 = vunpack.c.l.b16 %v1760
        %v1784 = vunpack.c.l.b16 %v1761
        %v1785 = vunpack.c.l.b16 %v1762
        %v1786 = vpack.c.b16 %v1783, %v1782
        %v1787 = vpack.c.b16 %v1785, %v1784
        %v1791 = vsel %vm870, %v1777, 0
        %1793 = vmatprep.subr.bf16.mxu0 0
        %1794 = vmatpush1.bf16.msra.mxu0 0
        %1795 = vmatprep.subr.bf16.mxu0 0
        %1796 = vmatpush1.bf16.msra.mxu0 0
        %1797 = vmatprep.subr.bf16.mxu0 0
        %1798 = vmatpush1.bf16.msra.mxu0 0
        %1799 = vmatprep.subr.bf16.mxu0 0
        %1800 = vmatpush1.bf16.msra.mxu0 0
        %1801 = vmatprep.subr.bf16.mxu0 0
        %1802 = vmatpush1.bf16.msra.mxu0 0
        %1803 = vmatprep.subr.bf16.mxu0 0
        %1804 = vmatpush1.bf16.msra.mxu0 0
        %1805 = vmatprep.subr.bf16.mxu0 0
        %1806 = vmatpush1.bf16.msra.mxu0 %v1787
        %1807 = vmatprep.subr.bf16.mxu0 0
        %1808 = vmatpush1.bf16.msra.mxu0 %v1786
        %1809 = vmatprep.subr.bf16.mxu0 0
        %1810 = vmatpush2.bf16.msra.mxu0 0
        %1811 = vmatprep.subr.bf16.mxu0 0
        %1812 = vmatpush2.bf16.msra.mxu0 0
        %1813 = vmatprep.subr.bf16.mxu0 0
        %1814 = vmatpush2.bf16.msra.mxu0 0
        %1815 = vmatprep.subr.bf16.mxu0 0
        %1816 = vmatpush2.bf16.msra.mxu0 0
        %1817 = vmatprep.subr.bf16.mxu0 0
        %1818 = vmatpush2.bf16.msra.mxu0 0
        %1819 = vmatprep.subr.bf16.mxu0 0
        %1820 = vmatpush2.bf16.msra.mxu0 0
        %1821 = vmatprep.subr.bf16.mxu0 0
        %1822 = vmatpush2.bf16.msra.mxu0 0
        %1823 = vmatprep.subr.bf16.mxu0 0
        %1824 = vmatpush2.bf16.msra.mxu0 0
        %1825 = vmatprep.mubr.bf16.mxu0 0
        %1826 = vmatmul.mubr.bf16.gmra.mxu0 %v1791
        %v1827 = vpop.f32.mrf.mxu0
        %v1828 = vadd.f32 %v1768, %v1827
        %v1829 = vpop.f32.mrf.mxu0
        %v1830 = vpop.f32.mrf.mxu0
        %v1831 = vpop.f32.mrf.mxu0
        %1832 = vdwg.mxu0
        %v1833 = vtanh.pop %v1828
        %v1834 = vld [vmem:[%s18] sm:$0x1]
        %v1836 = vlaneseq
        %v1837 = vshrl.u32 %v1836, 7
        %v1838 = vsub.s32 0, %v1837
        %v1839 = vrot.slane %v1834, %v1838
        %v1841 = vmul.f32 %v1833, %v1839
        %vm1842 = vcmask 254976
        %v1843 = vsel %vm1842, %v1841, 0.0
        %1844 = vadd.xlane.f32.xlu0 %v1843
        %v1845 = vpop.xlane.xlu0 %1844
        %v1846 = vld [vmem:[#allocation3] sm:$0x1]
        %v1848 = vlaneseq
        %v1849 = vshrl.u32 %v1848, 7
        %v1850 = vsub.s32 0, %v1849
        %v1851 = vrot.slane %v1846, %v1850
        %v1853 = vadd.f32 %v1845, %v1851
        %vm1854 = vcmask 1024
        %1855 = vst.msk [vmem:[%s20] sm:$0x3] %vm1854, %v1853
      $region108: #{bert_regressor_forward.1} parent=99 // pred_fallthru
        _
      // Predicated region
      $region109: #{bert_regressor_forward.1} parent=99 // pred_check
        %p1856 = pneg %p526
      $region110: #{bert_regressor_forward.1} parent=99 // pred_check_branch
        %1858 = sbr.rel (%p1856) target = $region112
      $region111: #{bert_regressor_forward.1} parent=99 // pred_region
        _
      $region112: #{bert_regressor_forward.1} parent=99 // pred_fallthru
        _
      // Predicated region
      $region113: #{bert_regressor_forward.1} parent=99 // pred_check
        %p1859 = pneg %p526
      $region114: #{bert_regressor_forward.1} parent=99 // pred_check_branch
        %1861 = sbr.rel (%p1859) target = $region116
      $region115: #{bert_regressor_forward.1} parent=99 // pred_region
        _
      $region116: #{bert_regressor_forward.1} parent=99 // pred_fallthru
        _
    $region100: #{bert_regressor_forward.1} parent=5 // pred_fallthru
      _
    %p1862 = scmp.le.s32.totalorder 2, %s28
    // Predicated region
    $region117: #{bert_regressor_forward.1} parent=5 // pred_check
      %p1863 = pneg %p1862
    $region118: #{bert_regressor_forward.1} parent=5 // pred_check_branch
      %1865 = sbr.rel (%p1863) target = $region120
    $region119: #{bert_regressor_forward.1} parent=5 // pred_region
      %s1866 = ssub.s32 %s28, 2
    $region120: #{bert_regressor_forward.1} parent=5 // pred_fallthru
      _
  $region6: #{bert_regressor_forward.1} parent=0 // loop_footer
    %s32 = sadd.s32 1, %s28
  $region7: #{bert_regressor_forward.1} parent=0 // loop_footer_branch
    %27 = sbr.rel target = $region3
  $region8: #{bert_regressor_forward.1} parent=0 // loop_exit
    _

</llo_original>
